<compile_context>
chip_gen: v7x
topology: tpu7x:2x2x1
jax: 0.10.0
libtpu: 0.0.40
codegen_flags: <defaults>
</compile_context>

<pallas_src>
import numpy as np
import jax
import jax.numpy as jnp
from jax.experimental import pallas as pl
from jax.experimental.pallas import tpu as pltpu


# ----------------------------------------------------------------------------
# Fused Pallas kernel (hot path)
# ----------------------------------------------------------------------------
def fused_conv_rbf_adjoint_kernel(p_ref, w1_ref, w2_ref, o_ref):
    """conv-matmul + Gaussian RBF mixture + adjoint-conv matmul, fused.

    p:  (CK+1, TN)  im2col patches (pixels on lanes) + trailing ones row
    w1: (F*M, CK+1) sqrt(prec)-scaled conv weights replicated over mixtures;
                    last column = -sqrt(prec)*centers (bias trick)
    w2: (CK, F*M)   adjoint conv weights pre-scaled by the RBF mixture weights
    o:  (CK, TN)    per-pixel tap contributions of K^T phi(K x)

    Both dots run at the storage precision (bf16 by default) with f32 MXU
    accumulation; d*d and exp() are evaluated in f32.
    """
    # d[f*M+m, n] = sqrt(prec) * (u[f, n] - c[m])  (precision folded into w1)
    d = jnp.dot(w1_ref[...], p_ref[...], preferred_element_type=jnp.float32)
    g = jnp.exp(-(d * d))                          # lane-dense Gaussian kernel
    # mixture sum over m and adjoint weight application in one MXU matmul
    o_ref[...] = jnp.dot(w2_ref[...], g.astype(w2_ref.dtype),
                         preferred_element_type=jnp.float32).astype(o_ref.dtype)


# ----------------------------------------------------------------------------
# Pallas wrapper
# ----------------------------------------------------------------------------
def _round_up(x, m):
    return -(-x // m) * m


def _pick_tile(n_cols, requested):
    """Largest 256-multiple tile <= requested.  When the problem is large we
    aim for >=4 grid steps (both v7x TensorCores busy, pipeline depth > 1),
    but never shrink the tile below 1024 (per-step overhead dominates there)."""
    requested = max(256, _round_up(int(requested), 256))
    n_pad_min = _round_up(int(n_cols), 256)
    tile = min(requested, n_pad_min)
    if n_pad_min >= 4 * 1024:
        tile = min(tile, max(1024, _round_up(-(-n_pad_min // 4), 256)))
    return max(tile, 256)


def _pad_cols(a, tile):
    n = a.shape[1]
    n_pad = _round_up(n, tile)
    if n_pad != n:
        a = jnp.pad(a, ((0, 0), (0, n_pad - n)))
    return a, n


def pallas_residual_rbf_core(patches_aug_t, w1_aug_t, wcomb_t,
                             out_dtype=jnp.bfloat16, tile=4096):
    ckp1, n0 = patches_aug_t.shape
    fm = w1_aug_t.shape[0]
    ck = wcomb_t.shape[0]

    tile = _pick_tile(n0, tile)
    patches_aug_t, _ = _pad_cols(patches_aug_t, tile)
    n_pad = patches_aug_t.shape[1]
    grid = (n_pad // tile,)

    flops = 2 * n_pad * ckp1 * fm + 2 * n_pad * fm * ck
    bytes_accessed = int(
        patches_aug_t.size * jnp.dtype(patches_aug_t.dtype).itemsize
        + w1_aug_t.size * jnp.dtype(w1_aug_t.dtype).itemsize
        + wcomb_t.size * jnp.dtype(wcomb_t.dtype).itemsize
        + n_pad * ck * jnp.dtype(out_dtype).itemsize)

    out = pl.pallas_call(
        fused_conv_rbf_adjoint_kernel,
        out_shape=jax.ShapeDtypeStruct((ck, n_pad), out_dtype),
        grid=grid,
        in_specs=[
            pl.BlockSpec((ckp1, tile), lambda i: (0, i)),   # patches (streamed)
            pl.BlockSpec((fm, ckp1), lambda i: (0, 0)),     # weights (resident)
            pl.BlockSpec((ck, fm), lambda i: (0, 0)),       # weights (resident)
        ],
        out_specs=pl.BlockSpec((ck, tile), lambda i: (0, i)),
        compiler_params=pltpu.CompilerParams(dimension_semantics=("parallel",)),
        cost_estimate=pl.CostEstimate(flops=flops,
                                      transcendentals=n_pad * fm,
                                      bytes_accessed=bytes_accessed),
    )(patches_aug_t, w1_aug_t, wcomb_t)
    return out[:, :n0]


# ----------------------------------------------------------------------------
# Plain-JAX glue (padding, im2col, weight normalization, pad adjoint, col2im)
# ----------------------------------------------------------------------------
def normalize_weights(w, scale, normalized=True, zero_mean=True):
    """pydl weight normalization: zero-mean + unit L2 norm per output feature,
    then multiplied by the learnable per-feature scale."""
    if zero_mean:
        w = w - jnp.mean(w, axis=(1, 2, 3), keepdims=True)
    if normalized:
        norm = jnp.sqrt(jnp.sum(w * w, axis=(1, 2, 3), keepdims=True))
        w = w / (norm + 1e-12)
        if scale is not None:
            w = w * scale[:, None, None, None]
    return w


def im2col_t(x, kh, kw):
    """x: (B, C, Hp, Wp) -> (C*kh*kw, B*Ho*Wo); row index = c*kh*kw + i*kw + j,
    column index = b*Ho*Wo + y*Wo + x (pixels on the fast axis)."""
    b, c, hp, wp = x.shape
    ho, wo = hp - kh + 1, wp - kw + 1
    cols = [x[:, :, i:i + ho, j:j + wo] for i in range(kh) for j in range(kw)]
    p = jnp.stack(cols, axis=2)             # (B, C, kh*kw, Ho, Wo)
    p = p.transpose(1, 2, 0, 3, 4)          # (C, kh*kw, B, Ho, Wo)
    return p.reshape(c * kh * kw, b * ho * wo), (ho, wo)


def sym_pad(x, pad):
    pt, pb, pleft, pr = pad
    return jnp.pad(x, ((0, 0), (0, 0), (pt, pb), (pleft, pr)), mode="symmetric")


def sym_pad_adjoint(y, pad, out_h, out_w):
    """Adjoint of symmetric padding: fold mirrored borders back into the core."""
    pt, pb, pleft, pr = pad
    core = y[:, :, pt:pt + out_h, :]
    if pt > 0:
        core = core.at[:, :, :pt, :].add(jnp.flip(y[:, :, :pt, :], axis=2))
    if pb > 0:
        core = core.at[:, :, out_h - pb:, :].add(
            jnp.flip(y[:, :, pt + out_h:, :], axis=2))
    out = core[:, :, :, pleft:pleft + out_w]
    if pleft > 0:
        out = out.at[:, :, :, :pleft].add(jnp.flip(core[:, :, :, :pleft], axis=3))
    if pr > 0:
        out = out.at[:, :, :, out_w - pr:].add(
            jnp.flip(core[:, :, :, pleft + out_w:], axis=3))
    return out


def col2im_add(t, b, c, kh, kw, ho, wo):
    """t: (C*kh*kw, B*Ho*Wo) tap contributions -> overlap-add onto (B,C,Hp,Wp)."""
    hp, wp = ho + kh - 1, wo + kw - 1
    tt = t.reshape(c, kh, kw, b, ho, wo).transpose(3, 0, 1, 2, 4, 5)
    g = jnp.zeros((b, c, hp, wp), jnp.float32)
    for i in range(kh):
        for j in range(kw):
            g = g.at[:, :, i:i + ho, j:j + wo].add(tt[:, :, i, j])
    return g


# ----------------------------------------------------------------------------
# Full forward
# ----------------------------------------------------------------------------
def residual_rbf_forward(x, stdn, params, rbf_data=None, net_input=None,
                         use_pallas=True, storage_dtype=jnp.bfloat16, tile=4096):
    if net_input is None:
        net_input = x

    wc = params["conv_weights"]                     # (F, C, kh, kw)
    f_, c_in, kh, kw = wc.shape
    ck = c_in * kh * kw
    pad = params["pad"]
    wf = normalize_weights(wc, params["scale_f"])
    wt = normalize_weights(wc, params["scale_t"])   # shared weights in _old
    rbf_w = params["rbf_weights"].astype(jnp.float32)      # (F, M)
    centers = params["rbf_centers"].astype(jnp.float32)    # (M,)
    m = centers.shape[0]
    prec = float(params["rbf_precision"])

    b, _, h, w = x.shape
    xp = sym_pad(x, pad)
    patches_t, (ho, wo) = im2col_t(xp, kh, kw)      # (C*kh*kw, B*Ho*Wo)
    n_pix = patches_t.shape[1]

    if use_pallas:
        compute_dtype = jnp.dtype(storage_dtype)    # bf16 default: MXU at full rate
        sqrt_prec = prec ** 0.5
        # patches augmented with a ones row -> centers fold into the matmul
        p_aug = jnp.concatenate(
            [patches_t, jnp.ones((1, n_pix), patches_t.dtype)], axis=0
        ).astype(compute_dtype)
        # (F*M, CK+1): row f*M+m = sqrt(prec) * [wf_flat[f, :], -centers[m]]
        # (precision pre-folded so the kernel computes exp(-(d*d)) directly)
        w1_rep = jnp.repeat(wf.reshape(f_, ck), m, axis=0)
        cent_rep = jnp.tile(centers, f_)
        w1_aug = (sqrt_prec * jnp.concatenate([w1_rep, -cent_rep[:, None]], axis=1)
                  ).astype(compute_dtype)
        # (CK, F*M): column f*M+m = rbf_w[f, m] * wt_flat[f, :]
        wcomb = (rbf_w[:, :, None] * wt.reshape(f_, ck)[:, None, :]
                 ).reshape(f_ * m, ck)
        t = pallas_residual_rbf_core(p_aug, w1_aug,
                                     wcomb.T.astype(compute_dtype),
                                     out_dtype=compute_dtype, tile=tile)
        g_full = col2im_add(t.astype(jnp.float32), b, c_in, kh, kw, ho, wo)
    else:
        # pure-JAX reference: conv -> RBF mixture -> conv_transpose (flipped w)
        u = wf.reshape(f_, ck) @ patches_t                       # (F, N)
        d = u[:, None, :] - centers[None, :, None]               # (F, M, N)
        phi = jnp.sum(jnp.exp(-prec * d * d) * rbf_w[:, :, None], axis=1)
        v = phi.reshape(f_, b, ho, wo).transpose(1, 0, 2, 3)     # (B, F, Ho, Wo)
        vz = jnp.pad(v, ((0, 0), (0, 0), (kh - 1, kh - 1), (kw - 1, kw - 1)))
        p2_t, (h2, w2) = im2col_t(vz, kh, kw)                    # (F*kh*kw, B*H2*W2)
        w2m = jnp.flip(wt, axis=(2, 3)).transpose(0, 2, 3, 1).reshape(
            f_ * kh * kw, c_in)
        g_full = (w2m.T @ p2_t).reshape(c_in, b, h2, w2).transpose(1, 0, 2, 3)

    g = sym_pad_adjoint(g_full, pad, h, w)                       # (B, C, H, W)

    alpha = jnp.exp(params["alpha_prox"])[0]
    stdn = jnp.asarray(stdn, jnp.float32).reshape(-1, 1, 1, 1)
    return net_input - alpha * stdn * g


# ----------------------------------------------------------------------------
# Deterministic parameter init (mimics init.dct filter-bank init)
# ----------------------------------------------------------------------------
def dct2_filters(kh, kw, num):
    def dct_mat(n):
        k = np.arange(n)[:, None]
        i = np.arange(n)[None, :]
        mm = np.cos(np.pi * (2 * i + 1) * k / (2 * n)) * np.sqrt(2.0 / n)
        mm[0] = mm[0] / np.sqrt(2.0)
        return mm
    dh, dw = dct_mat(kh), dct_mat(kw)
    basis = np.einsum("ab,cd->acbd", dh, dw).reshape(kh * kw, kh, kw)
    basis = basis[1:]                   # drop DC atom
    reps = -(-num // basis.shape[0])
    return np.tile(basis, (reps, 1, 1))[:num].astype(np.float32)


if __name__ == "__main__":
    B, C, H, W = 2, 3, 16, 16            # batch, input_channels, spatial
    F, K, M = 8, 5, 32                   # F*M = 256 matches the v6e/v7x MXU width
    lb, ub = -100.0, 100.0
    rbf_precision = 0.01
    pad = (K // 2, K // 2, K // 2, K // 2)   # getPad2RetainShape for odd kernel

    key = jax.random.PRNGKey(0)
    x = jax.random.normal(key, (B, C, H, W), dtype=jnp.float32)
    stdn = jnp.array([0.1, 0.2], dtype=jnp.float32)   # per-image noise std

    params = dict(
        conv_weights=jnp.asarray(dct2_filters(K, K, F * C).reshape(F, C, K, K)),
        scale_f=jnp.ones((F,), jnp.float32),          # Parameter filled with 1
        scale_t=jnp.ones((F,), jnp.float32),          # shared with scale_f
        alpha_prox=jnp.zeros((1,), jnp.float32),      # Parameter filled with 0
        rbf_weights=jnp.full((F, M), 1e-4, jnp.float32),
        rbf_centers=jnp.linspace(lb, ub, M, dtype=jnp.float32),
        rbf_precision=rbf_precision,
        pad=pad,
    )

    ref = residual_rbf_forward(x, stdn, params, use_pallas=False)
    ref = jax.block_until_ready(ref)

    # strict check of the fused kernel with f32 storage (pure kernel algebra)
    out_f32 = residual_rbf_forward(x, stdn, params, use_pallas=True,
                                   storage_dtype=jnp.float32)
    out_f32 = jax.block_until_ready(out_f32)
    np.testing.assert_allclose(np.asarray(out_f32), np.asarray(ref),
                               rtol=1e-4, atol=1e-4)

    # default bf16 path (bf16 MXU inputs + halved HBM traffic, f32 accumulation)
    out = residual_rbf_forward(x, stdn, params, use_pallas=True,
                               storage_dtype=jnp.bfloat16)
    out = jax.block_until_ready(out)
    assert out.shape == (B, C, H, W)
    np.testing.assert_allclose(np.asarray(out), np.asarray(ref),
                               rtol=1e-3, atol=1e-3)
    print("KERNEL_OK")
</pallas_src>

<mosaic_0001>
module attributes {stable_mosaic.version = 11 : i64} {
  func.func @fused_conv_rbf_adjoint_kernel(%arg0: i32, %arg1: memref<76x512xf32, #tpu.memory_space<vmem>>, %arg2: memref<256x76xf32, #tpu.memory_space<vmem>>, %arg3: memref<75x256xf32, #tpu.memory_space<vmem>>, %arg4: memref<75x512xf32, #tpu.memory_space<vmem>>) attributes {dimension_semantics = [#tpu.dimension_semantics<parallel>], iteration_bounds = array<i64: 1>, scalar_prefetch = 0 : i64, scratch_operands = 0 : i64, tpu.core_type = #tpu.core_type<tc>, window_params = [{transform_indices = @transform_0, window_bounds = array<i64: 76, 512>}, {pipeline_mode = #tpu.pipeline_mode<synchronous>, transform_indices = @transform_1, window_bounds = array<i64: 256, 76>}, {pipeline_mode = #tpu.pipeline_mode<synchronous>, transform_indices = @transform_2, window_bounds = array<i64: 75, 256>}, {transform_indices = @transform_3, window_bounds = array<i64: 75, 512>}]} {
    %c0 = arith.constant 0 : index
    %c0_0 = arith.constant 0 : index
    %0 = vector.load %arg2[%c0, %c0_0] : memref<256x76xf32, #tpu.memory_space<vmem>>, vector<256x76xf32>
    %c0_1 = arith.constant 0 : index
    %c0_2 = arith.constant 0 : index
    %1 = vector.load %arg1[%c0_1, %c0_2] : memref<76x512xf32, #tpu.memory_space<vmem>>, vector<76x512xf32>
    %cst = arith.constant dense<0.000000e+00> : vector<256x512xf32>
    %2 = tpu.matmul %0, %1, %cst {dimension_numbers = #tpu.dot_dimension_numbers<[1], [0], [0], [1], [0, 0, 1, 1], [], []>} : vector<256x76xf32>, vector<76x512xf32>, vector<256x512xf32> -> vector<256x512xf32>
    %3 = arith.mulf %2, %2 : vector<256x512xf32>
    %cst_3 = arith.constant 0.000000e+00 : f32
    %4 = vector.broadcast %cst_3 : f32 to vector<256x512xf32>
    %5 = arith.subf %4, %3 : vector<256x512xf32>
    %6 = math.exp %5 : vector<256x512xf32>
    %c0_4 = arith.constant 0 : index
    %c0_5 = arith.constant 0 : index
    %7 = vector.load %arg3[%c0_4, %c0_5] : memref<75x256xf32, #tpu.memory_space<vmem>>, vector<75x256xf32>
    %cst_6 = arith.constant dense<0.000000e+00> : vector<75x512xf32>
    %8 = tpu.matmul %7, %6, %cst_6 {dimension_numbers = #tpu.dot_dimension_numbers<[1], [0], [0], [1], [0, 0, 1, 1], [], []>} : vector<75x256xf32>, vector<256x512xf32>, vector<75x512xf32> -> vector<75x512xf32>
    %c0_7 = arith.constant 0 : index
    %c0_8 = arith.constant 0 : index
    %9 = vector.load %arg4[%c0_7, %c0_8] : memref<75x512xf32, #tpu.memory_space<vmem>>, vector<75x512xf32>
    tpu.vector_store %arg4[%c0_7, %c0_8], %8 {strides = array<i32>} : memref<75x512xf32, #tpu.memory_space<vmem>>, vector<75x512xf32>,
    return
  }
  func.func @transform_0(%arg0: i32) -> (i32, i32) {
    %c0_i32 = arith.constant 0 : i32
    %c0_i32_0 = arith.constant 0 : i32
    return %c0_i32, %arg0 : i32, i32
  }
  func.func @transform_1(%arg0: i32) -> (i32, i32) {
    %c0_i32 = arith.constant 0 : i32
    %c0_i32_0 = arith.constant 0 : i32
    %c0_i32_1 = arith.constant 0 : i32
    return %c0_i32, %c0_i32_0 : i32, i32
  }
  func.func @transform_2(%arg0: i32) -> (i32, i32) {
    %c0_i32 = arith.constant 0 : i32
    %c0_i32_0 = arith.constant 0 : i32
    %c0_i32_1 = arith.constant 0 : i32
    return %c0_i32, %c0_i32_0 : i32, i32
  }
  func.func @transform_3(%arg0: i32) -> (i32, i32) {
    %c0_i32 = arith.constant 0 : i32
    %c0_i32_0 = arith.constant 0 : i32
    return %c0_i32, %arg0 : i32, i32
  }
}

</mosaic_0001>

<llo_original>
// kernel: tpu_custom_call.1
$region0: #{tpu_custom_call.1}
  #allocation0 [shape = 'u32[]', space=smem, size = 0x4, offset = 0x4, fixed_abs, tag = 'smem constant byte address 0x4 - core index']
  #allocation1 [shape = 'u32[144,128]{1,0:T(1,128)}', space=vmem, size = 0x12000, scoped, tag = 'internal scratch']
  %s0 = inlined_call_operand.vmem [shape: f32[76,512], index: 0, kind: input, shape index: {}]
  %s1 = inlined_call_operand.vmem [shape: f32[256,76], index: 1, kind: input, shape index: {}]
  %s2 = inlined_call_operand.hbm [shape: f32[75,256], index: 2, kind: input, shape index: {}]
  %s3 = inlined_call_operand.hbm [shape: f32[75,512], index: 3, kind: output, shape index: {}]
  %s4 = sld [smem:[#allocation0]]
  $region26: #{tpu_custom_call.1} parent=0
    _
  %s6 = ssub.s32 1, %s4
  %s7 = scalar_select 0, %s6, %s4
  $region1: #{tpu_custom_call.1} parent=0
    #allocation2 [shape = 'u8[81920]{0}', space=vmem, size = 0x14000, scoped, tag = 'input window, operand 2, single buffered']
    #allocation3 [shape = 's32[1]{0}', space=sflag, size = 0x4, scoped, tag = 'scoped memory for tpu_custom_call.1']
    #allocation4 [shape = 's32[1]{0}', space=sflag, size = 0x4, scoped, tag = 'scoped memory for tpu_custom_call.1']
    #allocation5 [shape = 'u8[163840]{0}', space=vmem, size = 0x28000, scoped, tag = 'output window, operand 0, single buffered']
    %8 = vsyncpa [#allocation3], 0
    %9 = vsyncpa [#allocation4], 0
    // Predicated region
    $region2: #{tpu_custom_call.1} parent=1 // pred_check
      _
    $region3: #{tpu_custom_call.1} parent=1 // pred_check_branch
      %11 = sbr.rel (0) target = $region5
    $region4: #{tpu_custom_call.1} parent=1 // pred_region
      _
    $region5: #{tpu_custom_call.1} parent=1 // pred_fallthru
      _
    // Predicated region
    $region6: #{tpu_custom_call.1} parent=1 // pred_check
      _
    $region7: #{tpu_custom_call.1} parent=1 // pred_check_branch
      %13 = sbr.rel (0) target = $region9
    $region8: #{tpu_custom_call.1} parent=1 // pred_region
      _
    $region9: #{tpu_custom_call.1} parent=1 // pred_fallthru
      _
    // Predicated region
    $region10: #{tpu_custom_call.1} parent=1 // pred_check
      _
    $region11: #{tpu_custom_call.1} parent=1 // pred_check_branch
      %15 = sbr.rel (0) target = $region13
    $region12: #{tpu_custom_call.1} parent=1 // pred_region
      %s17 = ssub.s32 2560, 2560
      %18 = vsyncadd [#allocation3], %s17
      %s19 = sshll.u32 [#allocation2], 4
      %s20 = int_to_ptr.vmem [resolvable:$true] %s19
      %25 = dma.hbm_to_vmem [thread:$0]  %s2, 2560, %s20, [#allocation3], 256, 256, 16
    $region13: #{tpu_custom_call.1} parent=1 // pred_fallthru
      _
    // Predicated region
    $region14: #{tpu_custom_call.1} parent=1 // pred_check
      _
    $region15: #{tpu_custom_call.1} parent=1 // pred_check_branch
      %27 = sbr.rel (0) target = $region17
    $region16: #{tpu_custom_call.1} parent=1 // pred_region
      %28 = dma.done [#allocation3], 2560
    $region17: #{tpu_custom_call.1} parent=1 // pred_fallthru
      _
    %v29 = vld [vmem:[%s1] sm:$0xff]
    %v30 = vld [vmem:[%s1 + $0x8] sm:$0xff]
    %v31 = vld [vmem:[%s1 + $0x10] sm:$0xff]
    %v32 = vld [vmem:[%s1 + $0x18] sm:$0xff]
    %v33 = vld [vmem:[%s1 + $0x20] sm:$0xff]
    %v34 = vld [vmem:[%s1 + $0x28] sm:$0xff]
    %v35 = vld [vmem:[%s1 + $0x30] sm:$0xff]
    %v36 = vld [vmem:[%s1 + $0x38] sm:$0xff]
    %v37 = vld [vmem:[%s1 + $0x40] sm:$0xff]
    %v38 = vld [vmem:[%s1 + $0x48] sm:$0xff]
    %v39 = vld [vmem:[%s1 + $0x50] sm:$0xff]
    %v40 = vld [vmem:[%s1 + $0x58] sm:$0xff]
    %v41 = vld [vmem:[%s1 + $0x60] sm:$0xff]
    %v42 = vld [vmem:[%s1 + $0x68] sm:$0xff]
    %v43 = vld [vmem:[%s1 + $0x70] sm:$0xff]
    %v44 = vld [vmem:[%s1 + $0x78] sm:$0xff]
    %v45 = vld [vmem:[%s1 + $0x80] sm:$0xff]
    %v46 = vld [vmem:[%s1 + $0x88] sm:$0xff]
    %v47 = vld [vmem:[%s1 + $0x90] sm:$0xff]
    %v48 = vld [vmem:[%s1 + $0x98] sm:$0xff]
    %v49 = vld [vmem:[%s1 + $0xa0] sm:$0xff]
    %v50 = vld [vmem:[%s1 + $0xa8] sm:$0xff]
    %v51 = vld [vmem:[%s1 + $0xb0] sm:$0xff]
    %v52 = vld [vmem:[%s1 + $0xb8] sm:$0xff]
    %v53 = vld [vmem:[%s1 + $0xc0] sm:$0xff]
    %v54 = vld [vmem:[%s1 + $0xc8] sm:$0xff]
    %v55 = vld [vmem:[%s1 + $0xd0] sm:$0xff]
    %v56 = vld [vmem:[%s1 + $0xd8] sm:$0xff]
    %v57 = vld [vmem:[%s1 + $0xe0] sm:$0xff]
    %v58 = vld [vmem:[%s1 + $0xe8] sm:$0xff]
    %v59 = vld [vmem:[%s1 + $0xf0] sm:$0xff]
    %v60 = vld [vmem:[%s1 + $0xf8] sm:$0xff]
    %v61 = vld [vmem:[%s0] sm:$0xff]
    %v62 = vld [vmem:[%s0 + $0x8] sm:$0xff]
    %v63 = vld [vmem:[%s0 + $0x10] sm:$0xff]
    %v64 = vld [vmem:[%s0 + $0x18] sm:$0xff]
    %v65 = vld [vmem:[%s0 + $0x20] sm:$0xff]
    %v66 = vld [vmem:[%s0 + $0x28] sm:$0xff]
    %v67 = vld [vmem:[%s0 + $0x30] sm:$0xff]
    %v68 = vld [vmem:[%s0 + $0x38] sm:$0xff]
    %v69 = vld [vmem:[%s0 + $0x40] sm:$0xff]
    %v70 = vld [vmem:[%s0 + $0x48] sm:$0xff]
    %v71 = vld [vmem:[%s0 + $0x50] sm:$0xff]
    %v72 = vld [vmem:[%s0 + $0x58] sm:$0xff]
    %v73 = vld [vmem:[%s0 + $0x60] sm:$0xff]
    %v74 = vld [vmem:[%s0 + $0x68] sm:$0xff]
    %v75 = vld [vmem:[%s0 + $0x70] sm:$0xff]
    %v76 = vld [vmem:[%s0 + $0x78] sm:$0xff]
    %v77 = vld [vmem:[%s0 + $0x80] sm:$0xff]
    %v78 = vld [vmem:[%s0 + $0x88] sm:$0xff]
    %v79 = vld [vmem:[%s0 + $0x90] sm:$0xff]
    %v80 = vld [vmem:[%s0 + $0x98] sm:$0xff]
    %v81 = vld [vmem:[%s0 + $0xa0] sm:$0xff]
    %v82 = vld [vmem:[%s0 + $0xa8] sm:$0xff]
    %v83 = vld [vmem:[%s0 + $0xb0] sm:$0xff]
    %v84 = vld [vmem:[%s0 + $0xb8] sm:$0xff]
    %v85 = vld [vmem:[%s0 + $0xc0] sm:$0xff]
    %v86 = vld [vmem:[%s0 + $0xc8] sm:$0xff]
    %v87 = vld [vmem:[%s0 + $0xd0] sm:$0xff]
    %v88 = vld [vmem:[%s0 + $0xd8] sm:$0xff]
    %v89 = vld [vmem:[%s0 + $0xe0] sm:$0xff]
    %v90 = vld [vmem:[%s0 + $0xe8] sm:$0xff]
    %v91 = vld [vmem:[%s0 + $0xf0] sm:$0xff]
    %v92 = vld [vmem:[%s0 + $0xf8] sm:$0xff]
    %v93 = vld [vmem:[%s0 + $0x100] sm:$0xff]
    %v94 = vld [vmem:[%s0 + $0x108] sm:$0xff]
    %v95 = vld [vmem:[%s0 + $0x110] sm:$0xff]
    %v96 = vld [vmem:[%s0 + $0x118] sm:$0xff]
    %v97 = vld [vmem:[%s0 + $0x120] sm:$0xf]
    %v98 = vld [vmem:[%s0 + $0x128] sm:$0xf]
    %v99 = vld [vmem:[%s0 + $0x130] sm:$0xf]
    %v100 = vld [vmem:[%s0 + $0x138] sm:$0xf]
    %vm101 = vcmask 621568
    %v103 = vsel %vm101, %v29, 0
    %v106 = vsel %vm101, %v30, 0
    %v109 = vsel %vm101, %v31, 0
    %v112 = vsel %vm101, %v32, 0
    %v115 = vsel %vm101, %v33, 0
    %v118 = vsel %vm101, %v34, 0
    %v121 = vsel %vm101, %v35, 0
    %v124 = vsel %vm101, %v36, 0
    %v127 = vsel %vm101, %v37, 0
    %v130 = vsel %vm101, %v38, 0
    %v133 = vsel %vm101, %v39, 0
    %v136 = vsel %vm101, %v40, 0
    %v139 = vsel %vm101, %v41, 0
    %v142 = vsel %vm101, %v42, 0
    %v145 = vsel %vm101, %v43, 0
    %v148 = vsel %vm101, %v44, 0
    %v151 = vsel %vm101, %v45, 0
    %v154 = vsel %vm101, %v46, 0
    %v157 = vsel %vm101, %v47, 0
    %v160 = vsel %vm101, %v48, 0
    %v163 = vsel %vm101, %v49, 0
    %v166 = vsel %vm101, %v50, 0
    %v169 = vsel %vm101, %v51, 0
    %v172 = vsel %vm101, %v52, 0
    %v175 = vsel %vm101, %v53, 0
    %v178 = vsel %vm101, %v54, 0
    %v181 = vsel %vm101, %v55, 0
    %v184 = vsel %vm101, %v56, 0
    %v187 = vsel %vm101, %v57, 0
    %v190 = vsel %vm101, %v58, 0
    %v193 = vsel %vm101, %v59, 0
    %v196 = vsel %vm101, %v60, 0
    %vm198 = vcmask 1043456
    %v200 = vsel %vm198, %v97, 0
    %v203 = vsel %vm198, %v98, 0
    %v206 = vsel %vm198, %v99, 0
    %v209 = vsel %vm198, %v100, 0
    %211 = vmatprep.subr.mxu0 %v62
    %212 = vmatpush1.msra.mxu0 %v61
    %213 = vmatprep.subr.mxu0 %v66
    %214 = vmatpush1.msra.mxu0 %v65
    %215 = vmatprep.subr.mxu0 %v70
    %216 = vmatpush1.msra.mxu0 %v69
    %217 = vmatprep.subr.mxu0 %v74
    %218 = vmatpush1.msra.mxu0 %v73
    %219 = vmatprep.subr.mxu0 %v78
    %220 = vmatpush1.msra.mxu0 %v77
    %221 = vmatprep.subr.mxu0 %v82
    %222 = vmatpush1.msra.mxu0 %v81
    %223 = vmatprep.subr.mxu0 %v86
    %224 = vmatpush1.msra.mxu0 %v85
    %225 = vmatprep.subr.mxu0 %v90
    %226 = vmatpush1.msra.mxu0 %v89
    %227 = vmatprep.subr.mxu0 %v94
    %228 = vmatpush1.msra.mxu0 %v93
    %229 = vmatprep.subr.mxu0 %v203
    %230 = vmatpush1.msra.mxu0 %v200
    %231 = vmatprep.subr.mxu0 0.0
    %232 = vmatpush1.msra.mxu0 0.0
    %233 = vmatprep.subr.mxu0 0.0
    %234 = vmatpush1.msra.mxu0 0.0
    %235 = vmatprep.subr.mxu0 0.0
    %236 = vmatpush1.msra.mxu0 0.0
    %237 = vmatprep.subr.mxu0 0.0
    %238 = vmatpush1.msra.mxu0 0.0
    %239 = vmatprep.subr.mxu0 0.0
    %240 = vmatpush1.msra.mxu0 0.0
    %241 = vmatprep.subr.mxu0 0.0
    %242 = vmatpush1.msra.mxu0 0.0
    %243 = vmatprep.subr.mxu0 0.0
    %244 = vmatpush1.msra.mxu0 0.0
    %245 = vmatprep.subr.mxu0 0.0
    %246 = vmatpush1.msra.mxu0 0.0
    %247 = vmatprep.subr.mxu0 0.0
    %248 = vmatpush1.msra.mxu0 0.0
    %249 = vmatprep.subr.mxu0 0.0
    %250 = vmatpush1.msra.mxu0 0.0
    %251 = vmatprep.subr.mxu0 0.0
    %252 = vmatpush1.msra.mxu0 0.0
    %253 = vmatprep.subr.mxu0 0.0
    %254 = vmatpush1.msra.mxu0 0.0
    %255 = vmatprep.subr.mxu0 0.0
    %256 = vmatpush1.msra.mxu0 0.0
    %257 = vmatprep.subr.mxu0 0.0
    %258 = vmatpush1.msra.mxu0 0.0
    %259 = vmatprep.subr.mxu0 0.0
    %260 = vmatpush1.msra.mxu0 0.0
    %261 = vmatprep.subr.mxu0 0.0
    %262 = vmatpush1.msra.mxu0 0.0
    %263 = vmatprep.subr.mxu0 0.0
    %264 = vmatpush1.msra.mxu0 0.0
    %265 = vmatprep.subr.mxu0 0.0
    %266 = vmatpush1.msra.mxu0 0.0
    %267 = vmatprep.subr.mxu0 0.0
    %268 = vmatpush1.msra.mxu0 0.0
    %269 = vmatprep.subr.mxu0 0.0
    %270 = vmatpush1.msra.mxu0 0.0
    %271 = vmatprep.subr.mxu0 0.0
    %272 = vmatpush1.msra.mxu0 0.0
    %273 = vmatprep.subr.mxu0 0.0
    %274 = vmatpush1.msra.mxu0 0.0
    %275 = vmatprep.mubr.f32.mxu0 0.0
    %276 = vmatmul.mubr.f32.gmra.mrb[0].mxu0 %v103
    %v277 = vpop.f32.mrb[0].mxu0
    %v278 = vadd.f32 0.0, %v277
    %v279 = vpop.f32.mrb[0].mxu0
    %v280 = vadd.f32 0.0, %v279
    %281 = vmatprep.mubr.f32.mxu0 0.0
    %282 = vmatmul.mubr.f32.gmra.mrb[0].mxu0 %v106
    %v283 = vpop.f32.mrb[0].mxu0
    %v284 = vadd.f32 0.0, %v283
    %v285 = vpop.f32.mrb[0].mxu0
    %v286 = vadd.f32 0.0, %v285
    %287 = vmatprep.mubr.f32.mxu0 0.0
    %288 = vmatmul.mubr.f32.gmra.mrb[0].mxu0 %v109
    %v289 = vpop.f32.mrb[0].mxu0
    %v290 = vadd.f32 0.0, %v289
    %v291 = vpop.f32.mrb[0].mxu0
    %v292 = vadd.f32 0.0, %v291
    %293 = vmatprep.mubr.f32.mxu0 0.0
    %294 = vmatmul.mubr.f32.gmra.mrb[0].mxu0 %v112
    %v295 = vpop.f32.mrb[0].mxu0
    %v296 = vadd.f32 0.0, %v295
    %v297 = vpop.f32.mrb[0].mxu0
    %v298 = vadd.f32 0.0, %v297
    %299 = vmatprep.mubr.f32.mxu0 0.0
    %300 = vmatmul.mubr.f32.gmra.mrb[0].mxu0 %v115
    %v301 = vpop.f32.mrb[0].mxu0
    %v302 = vadd.f32 0.0, %v301
    %v303 = vpop.f32.mrb[0].mxu0
    %v304 = vadd.f32 0.0, %v303
    %305 = vmatprep.mubr.f32.mxu0 0.0
    %306 = vmatmul.mubr.f32.gmra.mrb[0].mxu0 %v118
    %v307 = vpop.f32.mrb[0].mxu0
    %v308 = vadd.f32 0.0, %v307
    %v309 = vpop.f32.mrb[0].mxu0
    %v310 = vadd.f32 0.0, %v309
    %311 = vmatprep.mubr.f32.mxu0 0.0
    %312 = vmatmul.mubr.f32.gmra.mrb[0].mxu0 %v121
    %v313 = vpop.f32.mrb[0].mxu0
    %v314 = vadd.f32 0.0, %v313
    %v315 = vpop.f32.mrb[0].mxu0
    %v316 = vadd.f32 0.0, %v315
    %317 = vmatprep.mubr.f32.mxu0 0.0
    %318 = vmatmul.mubr.f32.gmra.mrb[0].mxu0 %v124
    %v319 = vpop.f32.mrb[0].mxu0
    %v320 = vadd.f32 0.0, %v319
    %v321 = vpop.f32.mrb[0].mxu0
    %v322 = vadd.f32 0.0, %v321
    %323 = vmatprep.mubr.f32.mxu0 0.0
    %324 = vmatmul.mubr.f32.gmra.mrb[0].mxu0 %v127
    %v325 = vpop.f32.mrb[0].mxu0
    %v326 = vadd.f32 0.0, %v325
    %v327 = vpop.f32.mrb[0].mxu0
    %v328 = vadd.f32 0.0, %v327
    %329 = vmatprep.mubr.f32.mxu0 0.0
    %330 = vmatmul.mubr.f32.gmra.mrb[0].mxu0 %v130
    %v331 = vpop.f32.mrb[0].mxu0
    %v332 = vadd.f32 0.0, %v331
    %v333 = vpop.f32.mrb[0].mxu0
    %v334 = vadd.f32 0.0, %v333
    %335 = vmatprep.mubr.f32.mxu0 0.0
    %336 = vmatmul.mubr.f32.gmra.mrb[0].mxu0 %v133
    %v337 = vpop.f32.mrb[0].mxu0
    %v338 = vadd.f32 0.0, %v337
    %v339 = vpop.f32.mrb[0].mxu0
    %v340 = vadd.f32 0.0, %v339
    %341 = vmatprep.mubr.f32.mxu0 0.0
    %342 = vmatmul.mubr.f32.gmra.mrb[0].mxu0 %v136
    %v343 = vpop.f32.mrb[0].mxu0
    %v344 = vadd.f32 0.0, %v343
    %v345 = vpop.f32.mrb[0].mxu0
    %v346 = vadd.f32 0.0, %v345
    %347 = vmatprep.mubr.f32.mxu0 0.0
    %348 = vmatmul.mubr.f32.gmra.mrb[0].mxu0 %v139
    %v349 = vpop.f32.mrb[0].mxu0
    %v350 = vadd.f32 0.0, %v349
    %v351 = vpop.f32.mrb[0].mxu0
    %v352 = vadd.f32 0.0, %v351
    %353 = vmatprep.mubr.f32.mxu0 0.0
    %354 = vmatmul.mubr.f32.gmra.mrb[0].mxu0 %v142
    %v355 = vpop.f32.mrb[0].mxu0
    %v356 = vadd.f32 0.0, %v355
    %v357 = vpop.f32.mrb[0].mxu0
    %v358 = vadd.f32 0.0, %v357
    %359 = vmatprep.mubr.f32.mxu0 0.0
    %360 = vmatmul.mubr.f32.gmra.mrb[0].mxu0 %v145
    %v361 = vpop.f32.mrb[0].mxu0
    %v362 = vadd.f32 0.0, %v361
    %v363 = vpop.f32.mrb[0].mxu0
    %v364 = vadd.f32 0.0, %v363
    %365 = vmatprep.mubr.f32.mxu0 0.0
    %366 = vmatmul.mubr.f32.gmra.mrb[0].mxu0 %v148
    %v367 = vpop.f32.mrb[0].mxu0
    %v368 = vadd.f32 0.0, %v367
    %v369 = vpop.f32.mrb[0].mxu0
    %v370 = vadd.f32 0.0, %v369
    %371 = vmatprep.mubr.f32.mxu0 0.0
    %372 = vmatmul.mubr.f32.gmra.mrb[0].mxu0 %v151
    %v373 = vpop.f32.mrb[0].mxu0
    %v374 = vadd.f32 0.0, %v373
    %v375 = vpop.f32.mrb[0].mxu0
    %v376 = vadd.f32 0.0, %v375
    %377 = vmatprep.mubr.f32.mxu0 0.0
    %378 = vmatmul.mubr.f32.gmra.mrb[0].mxu0 %v154
    %v379 = vpop.f32.mrb[0].mxu0
    %v380 = vadd.f32 0.0, %v379
    %v381 = vpop.f32.mrb[0].mxu0
    %v382 = vadd.f32 0.0, %v381
    %383 = vmatprep.mubr.f32.mxu0 0.0
    %384 = vmatmul.mubr.f32.gmra.mrb[0].mxu0 %v157
    %v385 = vpop.f32.mrb[0].mxu0
    %v386 = vadd.f32 0.0, %v385
    %v387 = vpop.f32.mrb[0].mxu0
    %v388 = vadd.f32 0.0, %v387
    %389 = vmatprep.mubr.f32.mxu0 0.0
    %390 = vmatmul.mubr.f32.gmra.mrb[0].mxu0 %v160
    %v391 = vpop.f32.mrb[0].mxu0
    %v392 = vadd.f32 0.0, %v391
    %v393 = vpop.f32.mrb[0].mxu0
    %v394 = vadd.f32 0.0, %v393
    %395 = vmatprep.mubr.f32.mxu0 0.0
    %396 = vmatmul.mubr.f32.gmra.mrb[0].mxu0 %v163
    %v397 = vpop.f32.mrb[0].mxu0
    %v398 = vadd.f32 0.0, %v397
    %v399 = vpop.f32.mrb[0].mxu0
    %v400 = vadd.f32 0.0, %v399
    %401 = vmatprep.mubr.f32.mxu0 0.0
    %402 = vmatmul.mubr.f32.gmra.mrb[0].mxu0 %v166
    %v403 = vpop.f32.mrb[0].mxu0
    %v404 = vadd.f32 0.0, %v403
    %v405 = vpop.f32.mrb[0].mxu0
    %v406 = vadd.f32 0.0, %v405
    %407 = vmatprep.mubr.f32.mxu0 0.0
    %408 = vmatmul.mubr.f32.gmra.mrb[0].mxu0 %v169
    %v409 = vpop.f32.mrb[0].mxu0
    %v410 = vadd.f32 0.0, %v409
    %v411 = vpop.f32.mrb[0].mxu0
    %v412 = vadd.f32 0.0, %v411
    %413 = vmatprep.mubr.f32.mxu0 0.0
    %414 = vmatmul.mubr.f32.gmra.mrb[0].mxu0 %v172
    %v415 = vpop.f32.mrb[0].mxu0
    %v416 = vadd.f32 0.0, %v415
    %v417 = vpop.f32.mrb[0].mxu0
    %v418 = vadd.f32 0.0, %v417
    %419 = vmatprep.mubr.f32.mxu0 0.0
    %420 = vmatmul.mubr.f32.gmra.mrb[0].mxu0 %v175
    %v421 = vpop.f32.mrb[0].mxu0
    %v422 = vadd.f32 0.0, %v421
    %v423 = vpop.f32.mrb[0].mxu0
    %v424 = vadd.f32 0.0, %v423
    %425 = vmatprep.mubr.f32.mxu0 0.0
    %426 = vmatmul.mubr.f32.gmra.mrb[0].mxu0 %v178
    %v427 = vpop.f32.mrb[0].mxu0
    %v428 = vadd.f32 0.0, %v427
    %v429 = vpop.f32.mrb[0].mxu0
    %v430 = vadd.f32 0.0, %v429
    %431 = vmatprep.mubr.f32.mxu0 0.0
    %432 = vmatmul.mubr.f32.gmra.mrb[0].mxu0 %v181
    %v433 = vpop.f32.mrb[0].mxu0
    %v434 = vadd.f32 0.0, %v433
    %v435 = vpop.f32.mrb[0].mxu0
    %v436 = vadd.f32 0.0, %v435
    %437 = vmatprep.mubr.f32.mxu0 0.0
    %438 = vmatmul.mubr.f32.gmra.mrb[0].mxu0 %v184
    %v439 = vpop.f32.mrb[0].mxu0
    %v440 = vadd.f32 0.0, %v439
    %v441 = vpop.f32.mrb[0].mxu0
    %v442 = vadd.f32 0.0, %v441
    %443 = vmatprep.mubr.f32.mxu0 0.0
    %444 = vmatmul.mubr.f32.gmra.mrb[0].mxu0 %v187
    %v445 = vpop.f32.mrb[0].mxu0
    %v446 = vadd.f32 0.0, %v445
    %v447 = vpop.f32.mrb[0].mxu0
    %v448 = vadd.f32 0.0, %v447
    %449 = vmatprep.mubr.f32.mxu0 0.0
    %450 = vmatmul.mubr.f32.gmra.mrb[0].mxu0 %v190
    %v451 = vpop.f32.mrb[0].mxu0
    %v452 = vadd.f32 0.0, %v451
    %v453 = vpop.f32.mrb[0].mxu0
    %v454 = vadd.f32 0.0, %v453
    %455 = vmatprep.mubr.f32.mxu0 0.0
    %456 = vmatmul.mubr.f32.gmra.mrb[0].mxu0 %v193
    %v457 = vpop.f32.mrb[0].mxu0
    %v458 = vadd.f32 0.0, %v457
    %v459 = vpop.f32.mrb[0].mxu0
    %v460 = vadd.f32 0.0, %v459
    %461 = vmatprep.mubr.f32.mxu0 0.0
    %462 = vmatmul.mubr.f32.gmra.mrb[0].mxu0 %v196
    %v463 = vpop.f32.mrb[0].mxu0
    %v464 = vadd.f32 0.0, %v463
    %v465 = vpop.f32.mrb[0].mxu0
    %v466 = vadd.f32 0.0, %v465
    %467 = vdwg.mxu0
    %468 = vmatprep.subr.mxu0 %v64
    %469 = vmatpush1.msra.mxu0 %v63
    %470 = vmatprep.subr.mxu0 %v68
    %471 = vmatpush1.msra.mxu0 %v67
    %472 = vmatprep.subr.mxu0 %v72
    %473 = vmatpush1.msra.mxu0 %v71
    %474 = vmatprep.subr.mxu0 %v76
    %475 = vmatpush1.msra.mxu0 %v75
    %476 = vmatprep.subr.mxu0 %v80
    %477 = vmatpush1.msra.mxu0 %v79
    %478 = vmatprep.subr.mxu0 %v84
    %479 = vmatpush1.msra.mxu0 %v83
    %480 = vmatprep.subr.mxu0 %v88
    %481 = vmatpush1.msra.mxu0 %v87
    %482 = vmatprep.subr.mxu0 %v92
    %483 = vmatpush1.msra.mxu0 %v91
    %484 = vmatprep.subr.mxu0 %v96
    %485 = vmatpush1.msra.mxu0 %v95
    %486 = vmatprep.subr.mxu0 %v209
    %487 = vmatpush1.msra.mxu0 %v206
    %488 = vmatprep.subr.mxu0 0.0
    %489 = vmatpush1.msra.mxu0 0.0
    %490 = vmatprep.subr.mxu0 0.0
    %491 = vmatpush1.msra.mxu0 0.0
    %492 = vmatprep.subr.mxu0 0.0
    %493 = vmatpush1.msra.mxu0 0.0
    %494 = vmatprep.subr.mxu0 0.0
    %495 = vmatpush1.msra.mxu0 0.0
    %496 = vmatprep.subr.mxu0 0.0
    %497 = vmatpush1.msra.mxu0 0.0
    %498 = vmatprep.subr.mxu0 0.0
    %499 = vmatpush1.msra.mxu0 0.0
    %500 = vmatprep.subr.mxu0 0.0
    %501 = vmatpush1.msra.mxu0 0.0
    %502 = vmatprep.subr.mxu0 0.0
    %503 = vmatpush1.msra.mxu0 0.0
    %504 = vmatprep.subr.mxu0 0.0
    %505 = vmatpush1.msra.mxu0 0.0
    %506 = vmatprep.subr.mxu0 0.0
    %507 = vmatpush1.msra.mxu0 0.0
    %508 = vmatprep.subr.mxu0 0.0
    %509 = vmatpush1.msra.mxu0 0.0
    %510 = vmatprep.subr.mxu0 0.0
    %511 = vmatpush1.msra.mxu0 0.0
    %512 = vmatprep.subr.mxu0 0.0
    %513 = vmatpush1.msra.mxu0 0.0
    %514 = vmatprep.subr.mxu0 0.0
    %515 = vmatpush1.msra.mxu0 0.0
    %516 = vmatprep.subr.mxu0 0.0
    %517 = vmatpush1.msra.mxu0 0.0
    %518 = vmatprep.subr.mxu0 0.0
    %519 = vmatpush1.msra.mxu0 0.0
    %520 = vmatprep.subr.mxu0 0.0
    %521 = vmatpush1.msra.mxu0 0.0
    %522 = vmatprep.subr.mxu0 0.0
    %523 = vmatpush1.msra.mxu0 0.0
    %524 = vmatprep.subr.mxu0 0.0
    %525 = vmatpush1.msra.mxu0 0.0
    %526 = vmatprep.subr.mxu0 0.0
    %527 = vmatpush1.msra.mxu0 0.0
    %528 = vmatprep.subr.mxu0 0.0
    %529 = vmatpush1.msra.mxu0 0.0
    %530 = vmatprep.subr.mxu0 0.0
    %531 = vmatpush1.msra.mxu0 0.0
    %532 = vmatprep.mubr.f32.mxu0 0.0
    %533 = vmatmul.mubr.f32.gmra.mrb[0].mxu0 %v103
    %v534 = vpop.f32.mrb[0].mxu0
    %v535 = vadd.f32 0.0, %v534
    %v536 = vpop.f32.mrb[0].mxu0
    %v537 = vadd.f32 0.0, %v536
    %538 = vmatprep.mubr.f32.mxu0 0.0
    %539 = vmatmul.mubr.f32.gmra.mrb[0].mxu0 %v106
    %v540 = vpop.f32.mrb[0].mxu0
    %v541 = vadd.f32 0.0, %v540
    %v542 = vpop.f32.mrb[0].mxu0
    %v543 = vadd.f32 0.0, %v542
    %544 = vmatprep.mubr.f32.mxu0 0.0
    %545 = vmatmul.mubr.f32.gmra.mrb[0].mxu0 %v109
    %v546 = vpop.f32.mrb[0].mxu0
    %v547 = vadd.f32 0.0, %v546
    %v548 = vpop.f32.mrb[0].mxu0
    %v549 = vadd.f32 0.0, %v548
    %550 = vmatprep.mubr.f32.mxu0 0.0
    %551 = vmatmul.mubr.f32.gmra.mrb[0].mxu0 %v112
    %v552 = vpop.f32.mrb[0].mxu0
    %v553 = vadd.f32 0.0, %v552
    %v554 = vpop.f32.mrb[0].mxu0
    %v555 = vadd.f32 0.0, %v554
    %556 = vmatprep.mubr.f32.mxu0 0.0
    %557 = vmatmul.mubr.f32.gmra.mrb[0].mxu0 %v115
    %v558 = vpop.f32.mrb[0].mxu0
    %v559 = vadd.f32 0.0, %v558
    %v560 = vpop.f32.mrb[0].mxu0
    %v561 = vadd.f32 0.0, %v560
    %562 = vmatprep.mubr.f32.mxu0 0.0
    %563 = vmatmul.mubr.f32.gmra.mrb[0].mxu0 %v118
    %v564 = vpop.f32.mrb[0].mxu0
    %v565 = vadd.f32 0.0, %v564
    %v566 = vpop.f32.mrb[0].mxu0
    %v567 = vadd.f32 0.0, %v566
    %568 = vmatprep.mubr.f32.mxu0 0.0
    %569 = vmatmul.mubr.f32.gmra.mrb[0].mxu0 %v121
    %v570 = vpop.f32.mrb[0].mxu0
    %v571 = vadd.f32 0.0, %v570
    %v572 = vpop.f32.mrb[0].mxu0
    %v573 = vadd.f32 0.0, %v572
    %574 = vmatprep.mubr.f32.mxu0 0.0
    %575 = vmatmul.mubr.f32.gmra.mrb[0].mxu0 %v124
    %v576 = vpop.f32.mrb[0].mxu0
    %v577 = vadd.f32 0.0, %v576
    %v578 = vpop.f32.mrb[0].mxu0
    %v579 = vadd.f32 0.0, %v578
    %580 = vmatprep.mubr.f32.mxu0 0.0
    %581 = vmatmul.mubr.f32.gmra.mrb[0].mxu0 %v127
    %v582 = vpop.f32.mrb[0].mxu0
    %v583 = vadd.f32 0.0, %v582
    %v584 = vpop.f32.mrb[0].mxu0
    %v585 = vadd.f32 0.0, %v584
    %586 = vmatprep.mubr.f32.mxu0 0.0
    %587 = vmatmul.mubr.f32.gmra.mrb[0].mxu0 %v130
    %v588 = vpop.f32.mrb[0].mxu0
    %v589 = vadd.f32 0.0, %v588
    %v590 = vpop.f32.mrb[0].mxu0
    %v591 = vadd.f32 0.0, %v590
    %592 = vmatprep.mubr.f32.mxu0 0.0
    %593 = vmatmul.mubr.f32.gmra.mrb[0].mxu0 %v133
    %v594 = vpop.f32.mrb[0].mxu0
    %v595 = vadd.f32 0.0, %v594
    %v596 = vpop.f32.mrb[0].mxu0
    %v597 = vadd.f32 0.0, %v596
    %598 = vmatprep.mubr.f32.mxu0 0.0
    %599 = vmatmul.mubr.f32.gmra.mrb[0].mxu0 %v136
    %v600 = vpop.f32.mrb[0].mxu0
    %v601 = vadd.f32 0.0, %v600
    %v602 = vpop.f32.mrb[0].mxu0
    %v603 = vadd.f32 0.0, %v602
    %604 = vmatprep.mubr.f32.mxu0 0.0
    %605 = vmatmul.mubr.f32.gmra.mrb[0].mxu0 %v139
    %v606 = vpop.f32.mrb[0].mxu0
    %v607 = vadd.f32 0.0, %v606
    %v608 = vpop.f32.mrb[0].mxu0
    %v609 = vadd.f32 0.0, %v608
    %610 = vmatprep.mubr.f32.mxu0 0.0
    %611 = vmatmul.mubr.f32.gmra.mrb[0].mxu0 %v142
    %v612 = vpop.f32.mrb[0].mxu0
    %v613 = vadd.f32 0.0, %v612
    %v614 = vpop.f32.mrb[0].mxu0
    %v615 = vadd.f32 0.0, %v614
    %616 = vmatprep.mubr.f32.mxu0 0.0
    %617 = vmatmul.mubr.f32.gmra.mrb[0].mxu0 %v145
    %v618 = vpop.f32.mrb[0].mxu0
    %v619 = vadd.f32 0.0, %v618
    %v620 = vpop.f32.mrb[0].mxu0
    %v621 = vadd.f32 0.0, %v620
    %622 = vmatprep.mubr.f32.mxu0 0.0
    %623 = vmatmul.mubr.f32.gmra.mrb[0].mxu0 %v148
    %v624 = vpop.f32.mrb[0].mxu0
    %v625 = vadd.f32 0.0, %v624
    %v626 = vpop.f32.mrb[0].mxu0
    %v627 = vadd.f32 0.0, %v626
    %628 = vmatprep.mubr.f32.mxu0 0.0
    %629 = vmatmul.mubr.f32.gmra.mrb[0].mxu0 %v151
    %v630 = vpop.f32.mrb[0].mxu0
    %v631 = vadd.f32 0.0, %v630
    %v632 = vpop.f32.mrb[0].mxu0
    %v633 = vadd.f32 0.0, %v632
    %634 = vmatprep.mubr.f32.mxu0 0.0
    %635 = vmatmul.mubr.f32.gmra.mrb[0].mxu0 %v154
    %v636 = vpop.f32.mrb[0].mxu0
    %v637 = vadd.f32 0.0, %v636
    %v638 = vpop.f32.mrb[0].mxu0
    %v639 = vadd.f32 0.0, %v638
    %640 = vmatprep.mubr.f32.mxu0 0.0
    %641 = vmatmul.mubr.f32.gmra.mrb[0].mxu0 %v157
    %v642 = vpop.f32.mrb[0].mxu0
    %v643 = vadd.f32 0.0, %v642
    %v644 = vpop.f32.mrb[0].mxu0
    %v645 = vadd.f32 0.0, %v644
    %646 = vmatprep.mubr.f32.mxu0 0.0
    %647 = vmatmul.mubr.f32.gmra.mrb[0].mxu0 %v160
    %v648 = vpop.f32.mrb[0].mxu0
    %v649 = vadd.f32 0.0, %v648
    %v650 = vpop.f32.mrb[0].mxu0
    %v651 = vadd.f32 0.0, %v650
    %652 = vmatprep.mubr.f32.mxu0 0.0
    %653 = vmatmul.mubr.f32.gmra.mrb[0].mxu0 %v163
    %v654 = vpop.f32.mrb[0].mxu0
    %v655 = vadd.f32 0.0, %v654
    %v656 = vpop.f32.mrb[0].mxu0
    %v657 = vadd.f32 0.0, %v656
    %658 = vmatprep.mubr.f32.mxu0 0.0
    %659 = vmatmul.mubr.f32.gmra.mrb[0].mxu0 %v166
    %v660 = vpop.f32.mrb[0].mxu0
    %v661 = vadd.f32 0.0, %v660
    %v662 = vpop.f32.mrb[0].mxu0
    %v663 = vadd.f32 0.0, %v662
    %664 = vmatprep.mubr.f32.mxu0 0.0
    %665 = vmatmul.mubr.f32.gmra.mrb[0].mxu0 %v169
    %v666 = vpop.f32.mrb[0].mxu0
    %v667 = vadd.f32 0.0, %v666
    %v668 = vpop.f32.mrb[0].mxu0
    %v669 = vadd.f32 0.0, %v668
    %670 = vmatprep.mubr.f32.mxu0 0.0
    %671 = vmatmul.mubr.f32.gmra.mrb[0].mxu0 %v172
    %v672 = vpop.f32.mrb[0].mxu0
    %v673 = vadd.f32 0.0, %v672
    %v674 = vpop.f32.mrb[0].mxu0
    %v675 = vadd.f32 0.0, %v674
    %676 = vmatprep.mubr.f32.mxu0 0.0
    %677 = vmatmul.mubr.f32.gmra.mrb[0].mxu0 %v175
    %v678 = vpop.f32.mrb[0].mxu0
    %v679 = vadd.f32 0.0, %v678
    %v680 = vpop.f32.mrb[0].mxu0
    %v681 = vadd.f32 0.0, %v680
    %682 = vmatprep.mubr.f32.mxu0 0.0
    %683 = vmatmul.mubr.f32.gmra.mrb[0].mxu0 %v178
    %v684 = vpop.f32.mrb[0].mxu0
    %v685 = vadd.f32 0.0, %v684
    %v686 = vpop.f32.mrb[0].mxu0
    %v687 = vadd.f32 0.0, %v686
    %688 = vmatprep.mubr.f32.mxu0 0.0
    %689 = vmatmul.mubr.f32.gmra.mrb[0].mxu0 %v181
    %v690 = vpop.f32.mrb[0].mxu0
    %v691 = vadd.f32 0.0, %v690
    %v692 = vpop.f32.mrb[0].mxu0
    %v693 = vadd.f32 0.0, %v692
    %694 = vmatprep.mubr.f32.mxu0 0.0
    %695 = vmatmul.mubr.f32.gmra.mrb[0].mxu0 %v184
    %v696 = vpop.f32.mrb[0].mxu0
    %v697 = vadd.f32 0.0, %v696
    %v698 = vpop.f32.mrb[0].mxu0
    %v699 = vadd.f32 0.0, %v698
    %700 = vmatprep.mubr.f32.mxu0 0.0
    %701 = vmatmul.mubr.f32.gmra.mrb[0].mxu0 %v187
    %v702 = vpop.f32.mrb[0].mxu0
    %v703 = vadd.f32 0.0, %v702
    %v704 = vpop.f32.mrb[0].mxu0
    %v705 = vadd.f32 0.0, %v704
    %706 = vmatprep.mubr.f32.mxu0 0.0
    %707 = vmatmul.mubr.f32.gmra.mrb[0].mxu0 %v190
    %v708 = vpop.f32.mrb[0].mxu0
    %v709 = vadd.f32 0.0, %v708
    %v710 = vpop.f32.mrb[0].mxu0
    %v711 = vadd.f32 0.0, %v710
    %712 = vmatprep.mubr.f32.mxu0 0.0
    %713 = vmatmul.mubr.f32.gmra.mrb[0].mxu0 %v193
    %v714 = vpop.f32.mrb[0].mxu0
    %v715 = vadd.f32 0.0, %v714
    %v716 = vpop.f32.mrb[0].mxu0
    %v717 = vadd.f32 0.0, %v716
    %718 = vmatprep.mubr.f32.mxu0 0.0
    %719 = vmatmul.mubr.f32.gmra.mrb[0].mxu0 %v196
    %v720 = vpop.f32.mrb[0].mxu0
    %v721 = vadd.f32 0.0, %v720
    %v722 = vpop.f32.mrb[0].mxu0
    %v723 = vadd.f32 0.0, %v722
    %724 = vdwg.mxu0
    %v725 = vmul.f32 %v278, %v278
    %v726 = vmul.f32 %v280, %v280
    %v727 = vmul.f32 %v535, %v535
    %v728 = vmul.f32 %v537, %v537
    %v729 = vmul.f32 %v284, %v284
    %v730 = vmul.f32 %v286, %v286
    %v731 = vmul.f32 %v541, %v541
    %v732 = vmul.f32 %v543, %v543
    %v733 = vmul.f32 %v290, %v290
    %v734 = vmul.f32 %v292, %v292
    %v735 = vmul.f32 %v547, %v547
    %v736 = vmul.f32 %v549, %v549
    %v737 = vmul.f32 %v296, %v296
    %v738 = vmul.f32 %v298, %v298
    %v739 = vmul.f32 %v553, %v553
    %v740 = vmul.f32 %v555, %v555
    %v741 = vmul.f32 %v302, %v302
    %v742 = vmul.f32 %v304, %v304
    %v743 = vmul.f32 %v559, %v559
    %v744 = vmul.f32 %v561, %v561
    %v745 = vmul.f32 %v308, %v308
    %v746 = vmul.f32 %v310, %v310
    %v747 = vmul.f32 %v565, %v565
    %v748 = vmul.f32 %v567, %v567
    %v749 = vmul.f32 %v314, %v314
    %v750 = vmul.f32 %v316, %v316
    %v751 = vmul.f32 %v571, %v571
    %v752 = vmul.f32 %v573, %v573
    %v753 = vmul.f32 %v320, %v320
    %v754 = vmul.f32 %v322, %v322
    %v755 = vmul.f32 %v577, %v577
    %v756 = vmul.f32 %v579, %v579
    %v757 = vmul.f32 %v326, %v326
    %v758 = vmul.f32 %v328, %v328
    %v759 = vmul.f32 %v583, %v583
    %v760 = vmul.f32 %v585, %v585
    %v761 = vmul.f32 %v332, %v332
    %v762 = vmul.f32 %v334, %v334
    %v763 = vmul.f32 %v589, %v589
    %v764 = vmul.f32 %v591, %v591
    %v765 = vmul.f32 %v338, %v338
    %v766 = vmul.f32 %v340, %v340
    %v767 = vmul.f32 %v595, %v595
    %v768 = vmul.f32 %v597, %v597
    %v769 = vmul.f32 %v344, %v344
    %v770 = vmul.f32 %v346, %v346
    %v771 = vmul.f32 %v601, %v601
    %v772 = vmul.f32 %v603, %v603
    %v773 = vmul.f32 %v350, %v350
    %v774 = vmul.f32 %v352, %v352
    %v775 = vmul.f32 %v607, %v607
    %v776 = vmul.f32 %v609, %v609
    %v777 = vmul.f32 %v356, %v356
    %v778 = vmul.f32 %v358, %v358
    %v779 = vmul.f32 %v613, %v613
    %v780 = vmul.f32 %v615, %v615
    %v781 = vmul.f32 %v362, %v362
    %v782 = vmul.f32 %v364, %v364
    %v783 = vmul.f32 %v619, %v619
    %v784 = vmul.f32 %v621, %v621
    %v785 = vmul.f32 %v368, %v368
    %v786 = vmul.f32 %v370, %v370
    %v787 = vmul.f32 %v625, %v625
    %v788 = vmul.f32 %v627, %v627
    %v789 = vmul.f32 %v374, %v374
    %v790 = vmul.f32 %v376, %v376
    %v791 = vmul.f32 %v631, %v631
    %v792 = vmul.f32 %v633, %v633
    %v793 = vmul.f32 %v380, %v380
    %v794 = vmul.f32 %v382, %v382
    %v795 = vmul.f32 %v637, %v637
    %v796 = vmul.f32 %v639, %v639
    %v797 = vmul.f32 %v386, %v386
    %v798 = vmul.f32 %v388, %v388
    %v799 = vmul.f32 %v643, %v643
    %v800 = vmul.f32 %v645, %v645
    %v801 = vmul.f32 %v392, %v392
    %v802 = vmul.f32 %v394, %v394
    %v803 = vmul.f32 %v649, %v649
    %v804 = vmul.f32 %v651, %v651
    %v805 = vmul.f32 %v398, %v398
    %v806 = vmul.f32 %v400, %v400
    %v807 = vmul.f32 %v655, %v655
    %v808 = vmul.f32 %v657, %v657
    %v809 = vmul.f32 %v404, %v404
    %v810 = vmul.f32 %v406, %v406
    %v811 = vmul.f32 %v661, %v661
    %v812 = vmul.f32 %v663, %v663
    %v813 = vmul.f32 %v410, %v410
    %v814 = vmul.f32 %v412, %v412
    %v815 = vmul.f32 %v667, %v667
    %v816 = vmul.f32 %v669, %v669
    %v817 = vmul.f32 %v416, %v416
    %v818 = vmul.f32 %v418, %v418
    %v819 = vmul.f32 %v673, %v673
    %v820 = vmul.f32 %v675, %v675
    %v821 = vmul.f32 %v422, %v422
    %v822 = vmul.f32 %v424, %v424
    %v823 = vmul.f32 %v679, %v679
    %v824 = vmul.f32 %v681, %v681
    %v825 = vmul.f32 %v428, %v428
    %v826 = vmul.f32 %v430, %v430
    %v827 = vmul.f32 %v685, %v685
    %v828 = vmul.f32 %v687, %v687
    %v829 = vmul.f32 %v434, %v434
    %v830 = vmul.f32 %v436, %v436
    %v831 = vmul.f32 %v691, %v691
    %v832 = vmul.f32 %v693, %v693
    %v833 = vmul.f32 %v440, %v440
    %v834 = vmul.f32 %v442, %v442
    %v835 = vmul.f32 %v697, %v697
    %v836 = vmul.f32 %v699, %v699
    %v837 = vmul.f32 %v446, %v446
    %v838 = vmul.f32 %v448, %v448
    %v839 = vmul.f32 %v703, %v703
    %v840 = vmul.f32 %v705, %v705
    %v841 = vmul.f32 %v452, %v452
    %v842 = vmul.f32 %v454, %v454
    %v843 = vmul.f32 %v709, %v709
    %v844 = vmul.f32 %v711, %v711
    %v845 = vmul.f32 %v458, %v458
    %v846 = vmul.f32 %v460, %v460
    %v847 = vmul.f32 %v715, %v715
    %v848 = vmul.f32 %v717, %v717
    %v849 = vmul.f32 %v464, %v464
    %v850 = vmul.f32 %v466, %v466
    %v851 = vmul.f32 %v721, %v721
    %v852 = vmul.f32 %v723, %v723
    %v853 = vsub.f32 0.0, %v725
    %v854 = vsub.f32 0.0, %v726
    %v855 = vsub.f32 0.0, %v727
    %v856 = vsub.f32 0.0, %v728
    %v857 = vsub.f32 0.0, %v729
    %v858 = vsub.f32 0.0, %v730
    %v859 = vsub.f32 0.0, %v731
    %v860 = vsub.f32 0.0, %v732
    %v861 = vsub.f32 0.0, %v733
    %v862 = vsub.f32 0.0, %v734
    %v863 = vsub.f32 0.0, %v735
    %v864 = vsub.f32 0.0, %v736
    %v865 = vsub.f32 0.0, %v737
    %v866 = vsub.f32 0.0, %v738
    %v867 = vsub.f32 0.0, %v739
    %v868 = vsub.f32 0.0, %v740
    %v869 = vsub.f32 0.0, %v741
    %v870 = vsub.f32 0.0, %v742
    %v871 = vsub.f32 0.0, %v743
    %v872 = vsub.f32 0.0, %v744
    %v873 = vsub.f32 0.0, %v745
    %v874 = vsub.f32 0.0, %v746
    %v875 = vsub.f32 0.0, %v747
    %v876 = vsub.f32 0.0, %v748
    %v877 = vsub.f32 0.0, %v749
    %v878 = vsub.f32 0.0, %v750
    %v879 = vsub.f32 0.0, %v751
    %v880 = vsub.f32 0.0, %v752
    %v881 = vsub.f32 0.0, %v753
    %v882 = vsub.f32 0.0, %v754
    %v883 = vsub.f32 0.0, %v755
    %v884 = vsub.f32 0.0, %v756
    %v885 = vsub.f32 0.0, %v757
    %v886 = vsub.f32 0.0, %v758
    %v887 = vsub.f32 0.0, %v759
    %v888 = vsub.f32 0.0, %v760
    %v889 = vsub.f32 0.0, %v761
    %v890 = vsub.f32 0.0, %v762
    %v891 = vsub.f32 0.0, %v763
    %v892 = vsub.f32 0.0, %v764
    %v893 = vsub.f32 0.0, %v765
    %v894 = vsub.f32 0.0, %v766
    %v895 = vsub.f32 0.0, %v767
    %v896 = vsub.f32 0.0, %v768
    %v897 = vsub.f32 0.0, %v769
    %v898 = vsub.f32 0.0, %v770
    %v899 = vsub.f32 0.0, %v771
    %v900 = vsub.f32 0.0, %v772
    %v901 = vsub.f32 0.0, %v773
    %v902 = vsub.f32 0.0, %v774
    %v903 = vsub.f32 0.0, %v775
    %v904 = vsub.f32 0.0, %v776
    %v905 = vsub.f32 0.0, %v777
    %v906 = vsub.f32 0.0, %v778
    %v907 = vsub.f32 0.0, %v779
    %v908 = vsub.f32 0.0, %v780
    %v909 = vsub.f32 0.0, %v781
    %v910 = vsub.f32 0.0, %v782
    %v911 = vsub.f32 0.0, %v783
    %v912 = vsub.f32 0.0, %v784
    %v913 = vsub.f32 0.0, %v785
    %v914 = vsub.f32 0.0, %v786
    %v915 = vsub.f32 0.0, %v787
    %v916 = vsub.f32 0.0, %v788
    %v917 = vsub.f32 0.0, %v789
    %v918 = vsub.f32 0.0, %v790
    %v919 = vsub.f32 0.0, %v791
    %v920 = vsub.f32 0.0, %v792
    %v921 = vsub.f32 0.0, %v793
    %v922 = vsub.f32 0.0, %v794
    %v923 = vsub.f32 0.0, %v795
    %v924 = vsub.f32 0.0, %v796
    %v925 = vsub.f32 0.0, %v797
    %v926 = vsub.f32 0.0, %v798
    %v927 = vsub.f32 0.0, %v799
    %v928 = vsub.f32 0.0, %v800
    %v929 = vsub.f32 0.0, %v801
    %v930 = vsub.f32 0.0, %v802
    %v931 = vsub.f32 0.0, %v803
    %v932 = vsub.f32 0.0, %v804
    %v933 = vsub.f32 0.0, %v805
    %v934 = vsub.f32 0.0, %v806
    %v935 = vsub.f32 0.0, %v807
    %v936 = vsub.f32 0.0, %v808
    %v937 = vsub.f32 0.0, %v809
    %v938 = vsub.f32 0.0, %v810
    %v939 = vsub.f32 0.0, %v811
    %v940 = vsub.f32 0.0, %v812
    %v941 = vsub.f32 0.0, %v813
    %v942 = vsub.f32 0.0, %v814
    %v943 = vsub.f32 0.0, %v815
    %v944 = vsub.f32 0.0, %v816
    %v945 = vsub.f32 0.0, %v817
    %v946 = vsub.f32 0.0, %v818
    %v947 = vsub.f32 0.0, %v819
    %v948 = vsub.f32 0.0, %v820
    %v949 = vsub.f32 0.0, %v821
    %v950 = vsub.f32 0.0, %v822
    %v951 = vsub.f32 0.0, %v823
    %v952 = vsub.f32 0.0, %v824
    %v953 = vsub.f32 0.0, %v825
    %v954 = vsub.f32 0.0, %v826
    %v955 = vsub.f32 0.0, %v827
    %v956 = vsub.f32 0.0, %v828
    %v957 = vsub.f32 0.0, %v829
    %v958 = vsub.f32 0.0, %v830
    %v959 = vsub.f32 0.0, %v831
    %v960 = vsub.f32 0.0, %v832
    %v961 = vsub.f32 0.0, %v833
    %v962 = vsub.f32 0.0, %v834
    %v963 = vsub.f32 0.0, %v835
    %v964 = vsub.f32 0.0, %v836
    %v965 = vsub.f32 0.0, %v837
    %v966 = vsub.f32 0.0, %v838
    %v967 = vsub.f32 0.0, %v839
    %v968 = vsub.f32 0.0, %v840
    %v969 = vsub.f32 0.0, %v841
    %v970 = vsub.f32 0.0, %v842
    %v971 = vsub.f32 0.0, %v843
    %v972 = vsub.f32 0.0, %v844
    %v973 = vsub.f32 0.0, %v845
    %v974 = vsub.f32 0.0, %v846
    %v975 = vsub.f32 0.0, %v847
    %v976 = vsub.f32 0.0, %v848
    %v977 = vsub.f32 0.0, %v849
    %v978 = vsub.f32 0.0, %v850
    %v979 = vsub.f32 0.0, %v851
    %v980 = vsub.f32 0.0, %v852
    %v981 = vmul.f32 %v853, 1.442695
    %v982 = vpow.pop %v981
    %v983 = vmul.f32 %v854, 1.442695
    %v984 = vpow.pop %v983
    %v985 = vmul.f32 %v855, 1.442695
    %v986 = vpow.pop %v985
    %v987 = vmul.f32 %v856, 1.442695
    %v988 = vpow.pop %v987
    %v989 = vmul.f32 %v857, 1.442695
    %v990 = vpow.pop %v989
    %v991 = vmul.f32 %v858, 1.442695
    %v992 = vpow.pop %v991
    %v993 = vmul.f32 %v859, 1.442695
    %v994 = vpow.pop %v993
    %v995 = vmul.f32 %v860, 1.442695
    %v996 = vpow.pop %v995
    %v997 = vmul.f32 %v861, 1.442695
    %v998 = vpow.pop %v997
    %v999 = vmul.f32 %v862, 1.442695
    %v1000 = vpow.pop %v999
    %v1001 = vmul.f32 %v863, 1.442695
    %v1002 = vpow.pop %v1001
    %v1003 = vmul.f32 %v864, 1.442695
    %v1004 = vpow.pop %v1003
    %v1005 = vmul.f32 %v865, 1.442695
    %v1006 = vpow.pop %v1005
    %v1007 = vmul.f32 %v866, 1.442695
    %v1008 = vpow.pop %v1007
    %v1009 = vmul.f32 %v867, 1.442695
    %v1010 = vpow.pop %v1009
    %v1011 = vmul.f32 %v868, 1.442695
    %v1012 = vpow.pop %v1011
    %v1013 = vmul.f32 %v869, 1.442695
    %v1014 = vpow.pop %v1013
    %v1015 = vmul.f32 %v870, 1.442695
    %v1016 = vpow.pop %v1015
    %v1017 = vmul.f32 %v871, 1.442695
    %v1018 = vpow.pop %v1017
    %v1019 = vmul.f32 %v872, 1.442695
    %v1020 = vpow.pop %v1019
    %v1021 = vmul.f32 %v873, 1.442695
    %v1022 = vpow.pop %v1021
    %v1023 = vmul.f32 %v874, 1.442695
    %v1024 = vpow.pop %v1023
    %v1025 = vmul.f32 %v875, 1.442695
    %v1026 = vpow.pop %v1025
    %v1027 = vmul.f32 %v876, 1.442695
    %v1028 = vpow.pop %v1027
    %v1029 = vmul.f32 %v877, 1.442695
    %v1030 = vpow.pop %v1029
    %v1031 = vmul.f32 %v878, 1.442695
    %v1032 = vpow.pop %v1031
    %v1033 = vmul.f32 %v879, 1.442695
    %v1034 = vpow.pop %v1033
    %v1035 = vmul.f32 %v880, 1.442695
    %v1036 = vpow.pop %v1035
    %v1037 = vmul.f32 %v881, 1.442695
    %v1038 = vpow.pop %v1037
    %v1039 = vmul.f32 %v882, 1.442695
    %v1040 = vpow.pop %v1039
    %v1041 = vmul.f32 %v883, 1.442695
    %v1042 = vpow.pop %v1041
    %v1043 = vmul.f32 %v884, 1.442695
    %v1044 = vpow.pop %v1043
    %v1045 = vmul.f32 %v885, 1.442695
    %v1046 = vpow.pop %v1045
    %v1047 = vmul.f32 %v886, 1.442695
    %v1048 = vpow.pop %v1047
    %v1049 = vmul.f32 %v887, 1.442695
    %v1050 = vpow.pop %v1049
    %v1051 = vmul.f32 %v888, 1.442695
    %v1052 = vpow.pop %v1051
    %v1053 = vmul.f32 %v889, 1.442695
    %v1054 = vpow.pop %v1053
    %v1055 = vmul.f32 %v890, 1.442695
    %v1056 = vpow.pop %v1055
    %v1057 = vmul.f32 %v891, 1.442695
    %v1058 = vpow.pop %v1057
    %v1059 = vmul.f32 %v892, 1.442695
    %v1060 = vpow.pop %v1059
    %v1061 = vmul.f32 %v893, 1.442695
    %v1062 = vpow.pop %v1061
    %v1063 = vmul.f32 %v894, 1.442695
    %v1064 = vpow.pop %v1063
    %v1065 = vmul.f32 %v895, 1.442695
    %v1066 = vpow.pop %v1065
    %v1067 = vmul.f32 %v896, 1.442695
    %v1068 = vpow.pop %v1067
    %v1069 = vmul.f32 %v897, 1.442695
    %v1070 = vpow.pop %v1069
    %v1071 = vmul.f32 %v898, 1.442695
    %v1072 = vpow.pop %v1071
    %v1073 = vmul.f32 %v899, 1.442695
    %v1074 = vpow.pop %v1073
    %v1075 = vmul.f32 %v900, 1.442695
    %v1076 = vpow.pop %v1075
    %v1077 = vmul.f32 %v901, 1.442695
    %v1078 = vpow.pop %v1077
    %v1079 = vmul.f32 %v902, 1.442695
    %v1080 = vpow.pop %v1079
    %v1081 = vmul.f32 %v903, 1.442695
    %v1082 = vpow.pop %v1081
    %v1083 = vmul.f32 %v904, 1.442695
    %v1084 = vpow.pop %v1083
    %v1085 = vmul.f32 %v905, 1.442695
    %v1086 = vpow.pop %v1085
    %v1087 = vmul.f32 %v906, 1.442695
    %v1088 = vpow.pop %v1087
    %v1089 = vmul.f32 %v907, 1.442695
    %v1090 = vpow.pop %v1089
    %v1091 = vmul.f32 %v908, 1.442695
    %v1092 = vpow.pop %v1091
    %v1093 = vmul.f32 %v909, 1.442695
    %v1094 = vpow.pop %v1093
    %v1095 = vmul.f32 %v910, 1.442695
    %v1096 = vpow.pop %v1095
    %v1097 = vmul.f32 %v911, 1.442695
    %v1098 = vpow.pop %v1097
    %v1099 = vmul.f32 %v912, 1.442695
    %v1100 = vpow.pop %v1099
    %v1101 = vmul.f32 %v913, 1.442695
    %v1102 = vpow.pop %v1101
    %v1103 = vmul.f32 %v914, 1.442695
    %v1104 = vpow.pop %v1103
    %v1105 = vmul.f32 %v915, 1.442695
    %v1106 = vpow.pop %v1105
    %v1107 = vmul.f32 %v916, 1.442695
    %v1108 = vpow.pop %v1107
    %v1109 = vmul.f32 %v917, 1.442695
    %v1110 = vpow.pop %v1109
    %v1111 = vmul.f32 %v918, 1.442695
    %v1112 = vpow.pop %v1111
    %v1113 = vmul.f32 %v919, 1.442695
    %v1114 = vpow.pop %v1113
    %v1115 = vmul.f32 %v920, 1.442695
    %v1116 = vpow.pop %v1115
    %v1117 = vmul.f32 %v921, 1.442695
    %v1118 = vpow.pop %v1117
    %v1119 = vmul.f32 %v922, 1.442695
    %v1120 = vpow.pop %v1119
    %v1121 = vmul.f32 %v923, 1.442695
    %v1122 = vpow.pop %v1121
    %v1123 = vmul.f32 %v924, 1.442695
    %v1124 = vpow.pop %v1123
    %v1125 = vmul.f32 %v925, 1.442695
    %v1126 = vpow.pop %v1125
    %v1127 = vmul.f32 %v926, 1.442695
    %v1128 = vpow.pop %v1127
    %v1129 = vmul.f32 %v927, 1.442695
    %v1130 = vpow.pop %v1129
    %v1131 = vmul.f32 %v928, 1.442695
    %v1132 = vpow.pop %v1131
    %v1133 = vmul.f32 %v929, 1.442695
    %v1134 = vpow.pop %v1133
    %v1135 = vmul.f32 %v930, 1.442695
    %v1136 = vpow.pop %v1135
    %v1137 = vmul.f32 %v931, 1.442695
    %v1138 = vpow.pop %v1137
    %v1139 = vmul.f32 %v932, 1.442695
    %v1140 = vpow.pop %v1139
    %v1141 = vmul.f32 %v933, 1.442695
    %v1142 = vpow.pop %v1141
    %v1143 = vmul.f32 %v934, 1.442695
    %v1144 = vpow.pop %v1143
    %v1145 = vmul.f32 %v935, 1.442695
    %v1146 = vpow.pop %v1145
    %v1147 = vmul.f32 %v936, 1.442695
    %v1148 = vpow.pop %v1147
    %v1149 = vmul.f32 %v937, 1.442695
    %v1150 = vpow.pop %v1149
    %v1151 = vmul.f32 %v938, 1.442695
    %v1152 = vpow.pop %v1151
    %v1153 = vmul.f32 %v939, 1.442695
    %v1154 = vpow.pop %v1153
    %v1155 = vmul.f32 %v940, 1.442695
    %v1156 = vpow.pop %v1155
    %v1157 = vmul.f32 %v941, 1.442695
    %v1158 = vpow.pop %v1157
    %v1159 = vmul.f32 %v942, 1.442695
    %v1160 = vpow.pop %v1159
    %v1161 = vmul.f32 %v943, 1.442695
    %v1162 = vpow.pop %v1161
    %v1163 = vmul.f32 %v944, 1.442695
    %v1164 = vpow.pop %v1163
    %v1165 = vmul.f32 %v945, 1.442695
    %v1166 = vpow.pop %v1165
    %v1167 = vmul.f32 %v946, 1.442695
    %v1168 = vpow.pop %v1167
    %v1169 = vmul.f32 %v947, 1.442695
    %v1170 = vpow.pop %v1169
    %v1171 = vmul.f32 %v948, 1.442695
    %v1172 = vpow.pop %v1171
    %v1173 = vmul.f32 %v949, 1.442695
    %v1174 = vpow.pop %v1173
    %v1175 = vmul.f32 %v950, 1.442695
    %v1176 = vpow.pop %v1175
    %v1177 = vmul.f32 %v951, 1.442695
    %v1178 = vpow.pop %v1177
    %v1179 = vmul.f32 %v952, 1.442695
    %v1180 = vpow.pop %v1179
    %v1181 = vmul.f32 %v953, 1.442695
    %v1182 = vpow.pop %v1181
    %v1183 = vmul.f32 %v954, 1.442695
    %v1184 = vpow.pop %v1183
    %v1185 = vmul.f32 %v955, 1.442695
    %v1186 = vpow.pop %v1185
    %v1187 = vmul.f32 %v956, 1.442695
    %v1188 = vpow.pop %v1187
    %v1189 = vmul.f32 %v957, 1.442695
    %v1190 = vpow.pop %v1189
    %v1191 = vmul.f32 %v958, 1.442695
    %v1192 = vpow.pop %v1191
    %v1193 = vmul.f32 %v959, 1.442695
    %v1194 = vpow.pop %v1193
    %v1195 = vmul.f32 %v960, 1.442695
    %v1196 = vpow.pop %v1195
    %v1197 = vmul.f32 %v961, 1.442695
    %v1198 = vpow.pop %v1197
    %v1199 = vmul.f32 %v962, 1.442695
    %v1200 = vpow.pop %v1199
    %v1201 = vmul.f32 %v963, 1.442695
    %v1202 = vpow.pop %v1201
    %v1203 = vmul.f32 %v964, 1.442695
    %v1204 = vpow.pop %v1203
    %v1205 = vmul.f32 %v965, 1.442695
    %v1206 = vpow.pop %v1205
    %v1207 = vmul.f32 %v966, 1.442695
    %v1208 = vpow.pop %v1207
    %v1209 = vmul.f32 %v967, 1.442695
    %v1210 = vpow.pop %v1209
    %v1211 = vmul.f32 %v968, 1.442695
    %v1212 = vpow.pop %v1211
    %v1213 = vmul.f32 %v969, 1.442695
    %v1214 = vpow.pop %v1213
    %v1215 = vmul.f32 %v970, 1.442695
    %v1216 = vpow.pop %v1215
    %v1217 = vmul.f32 %v971, 1.442695
    %v1218 = vpow.pop %v1217
    %v1219 = vmul.f32 %v972, 1.442695
    %v1220 = vpow.pop %v1219
    %v1221 = vmul.f32 %v973, 1.442695
    %v1222 = vpow.pop %v1221
    %v1223 = vmul.f32 %v974, 1.442695
    %v1224 = vpow.pop %v1223
    %v1225 = vmul.f32 %v975, 1.442695
    %v1226 = vpow.pop %v1225
    %v1227 = vmul.f32 %v976, 1.442695
    %v1228 = vpow.pop %v1227
    %v1229 = vmul.f32 %v977, 1.442695
    %v1230 = vpow.pop %v1229
    %v1231 = vmul.f32 %v978, 1.442695
    %v1232 = vpow.pop %v1231
    %v1233 = vmul.f32 %v979, 1.442695
    %v1234 = vpow.pop %v1233
    %v1235 = vmul.f32 %v980, 1.442695
    %v1236 = vpow.pop %v1235
    %v1237 = vld [vmem:[#allocation2] sm:$0xff]
    %v1238 = vld [vmem:[#allocation2 + $0x8] sm:$0xff]
    %v1239 = vld [vmem:[#allocation2 + $0x10] sm:$0xff]
    %v1240 = vld [vmem:[#allocation2 + $0x18] sm:$0xff]
    %v1241 = vld [vmem:[#allocation2 + $0x20] sm:$0xff]
    %v1242 = vld [vmem:[#allocation2 + $0x28] sm:$0xff]
    %v1243 = vld [vmem:[#allocation2 + $0x30] sm:$0xff]
    %v1244 = vld [vmem:[#allocation2 + $0x38] sm:$0xff]
    %v1245 = vld [vmem:[#allocation2 + $0x40] sm:$0xff]
    %v1246 = vld [vmem:[#allocation2 + $0x48] sm:$0xff]
    %v1247 = vld [vmem:[#allocation2 + $0x50] sm:$0xff]
    %v1248 = vld [vmem:[#allocation2 + $0x58] sm:$0xff]
    %v1249 = vld [vmem:[#allocation2 + $0x60] sm:$0xff]
    %v1250 = vld [vmem:[#allocation2 + $0x68] sm:$0xff]
    %v1251 = vld [vmem:[#allocation2 + $0x70] sm:$0xff]
    %v1252 = vld [vmem:[#allocation2 + $0x78] sm:$0xff]
    %v1253 = vld [vmem:[#allocation2 + $0x80] sm:$0xff]
    %v1254 = vld [vmem:[#allocation2 + $0x88] sm:$0xff]
    %v1255 = vld [vmem:[#allocation2 + $0x90] sm:$0x7]
    %v1256 = vld [vmem:[#allocation2 + $0x98] sm:$0x7]
    %1257 = vmatprep.subr.mxu0 %v984
    %1258 = vmatpush1.msra.mxu0 %v982
    %1259 = vmatprep.subr.mxu0 %v992
    %1260 = vmatpush1.msra.mxu0 %v990
    %1261 = vmatprep.subr.mxu0 %v1000
    %1262 = vmatpush1.msra.mxu0 %v998
    %1263 = vmatprep.subr.mxu0 %v1008
    %1264 = vmatpush1.msra.mxu0 %v1006
    %1265 = vmatprep.subr.mxu0 %v1016
    %1266 = vmatpush1.msra.mxu0 %v1014
    %1267 = vmatprep.subr.mxu0 %v1024
    %1268 = vmatpush1.msra.mxu0 %v1022
    %1269 = vmatprep.subr.mxu0 %v1032
    %1270 = vmatpush1.msra.mxu0 %v1030
    %1271 = vmatprep.subr.mxu0 %v1040
    %1272 = vmatpush1.msra.mxu0 %v1038
    %1273 = vmatprep.subr.mxu0 %v1048
    %1274 = vmatpush1.msra.mxu0 %v1046
    %1275 = vmatprep.subr.mxu0 %v1056
    %1276 = vmatpush1.msra.mxu0 %v1054
    %1277 = vmatprep.subr.mxu0 %v1064
    %1278 = vmatpush1.msra.mxu0 %v1062
    %1279 = vmatprep.subr.mxu0 %v1072
    %1280 = vmatpush1.msra.mxu0 %v1070
    %1281 = vmatprep.subr.mxu0 %v1080
    %1282 = vmatpush1.msra.mxu0 %v1078
    %1283 = vmatprep.subr.mxu0 %v1088
    %1284 = vmatpush1.msra.mxu0 %v1086
    %1285 = vmatprep.subr.mxu0 %v1096
    %1286 = vmatpush1.msra.mxu0 %v1094
    %1287 = vmatprep.subr.mxu0 %v1104
    %1288 = vmatpush1.msra.mxu0 %v1102
    %1289 = vmatprep.subr.mxu0 %v1112
    %1290 = vmatpush1.msra.mxu0 %v1110
    %1291 = vmatprep.subr.mxu0 %v1120
    %1292 = vmatpush1.msra.mxu0 %v1118
    %1293 = vmatprep.subr.mxu0 %v1128
    %1294 = vmatpush1.msra.mxu0 %v1126
    %1295 = vmatprep.subr.mxu0 %v1136
    %1296 = vmatpush1.msra.mxu0 %v1134
    %1297 = vmatprep.subr.mxu0 %v1144
    %1298 = vmatpush1.msra.mxu0 %v1142
    %1299 = vmatprep.subr.mxu0 %v1152
    %1300 = vmatpush1.msra.mxu0 %v1150
    %1301 = vmatprep.subr.mxu0 %v1160
    %1302 = vmatpush1.msra.mxu0 %v1158
    %1303 = vmatprep.subr.mxu0 %v1168
    %1304 = vmatpush1.msra.mxu0 %v1166
    %1305 = vmatprep.subr.mxu0 %v1176
    %1306 = vmatpush1.msra.mxu0 %v1174
    %1307 = vmatprep.subr.mxu0 %v1184
    %1308 = vmatpush1.msra.mxu0 %v1182
    %1309 = vmatprep.subr.mxu0 %v1192
    %1310 = vmatpush1.msra.mxu0 %v1190
    %1311 = vmatprep.subr.mxu0 %v1200
    %1312 = vmatpush1.msra.mxu0 %v1198
    %1313 = vmatprep.subr.mxu0 %v1208
    %1314 = vmatpush1.msra.mxu0 %v1206
    %1315 = vmatprep.subr.mxu0 %v1216
    %1316 = vmatpush1.msra.mxu0 %v1214
    %1317 = vmatprep.subr.mxu0 %v1224
    %1318 = vmatpush1.msra.mxu0 %v1222
    %1319 = vmatprep.subr.mxu0 %v1232
    %1320 = vmatpush1.msra.mxu0 %v1230
    %1321 = vmatprep.mubr.f32.mxu0 %v1238
    %1322 = vmatmul.mubr.f32.gmra.mrb[0].mxu0 %v1237
    %v1323 = vpop.f32.mrb[0].mxu0
    %v1324 = vadd.f32 0.0, %v1323
    %v1325 = vpop.f32.mrb[0].mxu0
    %v1326 = vadd.f32 0.0, %v1325
    %1327 = vmatprep.mubr.f32.mxu0 %v1240
    %1328 = vmatmul.mubr.f32.gmra.mrb[0].mxu0 %v1239
    %v1329 = vpop.f32.mrb[0].mxu0
    %v1330 = vadd.f32 0.0, %v1329
    %v1331 = vpop.f32.mrb[0].mxu0
    %v1332 = vadd.f32 0.0, %v1331
    %1333 = vmatprep.mubr.f32.mxu0 %v1242
    %1334 = vmatmul.mubr.f32.gmra.mrb[0].mxu0 %v1241
    %v1335 = vpop.f32.mrb[0].mxu0
    %v1336 = vadd.f32 0.0, %v1335
    %v1337 = vpop.f32.mrb[0].mxu0
    %v1338 = vadd.f32 0.0, %v1337
    %1339 = vmatprep.mubr.f32.mxu0 %v1244
    %1340 = vmatmul.mubr.f32.gmra.mrb[0].mxu0 %v1243
    %v1341 = vpop.f32.mrb[0].mxu0
    %v1342 = vadd.f32 0.0, %v1341
    %v1343 = vpop.f32.mrb[0].mxu0
    %v1344 = vadd.f32 0.0, %v1343
    %1345 = vmatprep.mubr.f32.mxu0 %v1246
    %1346 = vmatmul.mubr.f32.gmra.mrb[0].mxu0 %v1245
    %v1347 = vpop.f32.mrb[0].mxu0
    %v1348 = vadd.f32 0.0, %v1347
    %v1349 = vpop.f32.mrb[0].mxu0
    %v1350 = vadd.f32 0.0, %v1349
    %1351 = vmatprep.mubr.f32.mxu0 %v1248
    %1352 = vmatmul.mubr.f32.gmra.mrb[0].mxu0 %v1247
    %v1353 = vpop.f32.mrb[0].mxu0
    %v1354 = vadd.f32 0.0, %v1353
    %v1355 = vpop.f32.mrb[0].mxu0
    %v1356 = vadd.f32 0.0, %v1355
    %1357 = vmatprep.mubr.f32.mxu0 %v1250
    %1358 = vmatmul.mubr.f32.gmra.mrb[0].mxu0 %v1249
    %v1359 = vpop.f32.mrb[0].mxu0
    %v1360 = vadd.f32 0.0, %v1359
    %v1361 = vpop.f32.mrb[0].mxu0
    %v1362 = vadd.f32 0.0, %v1361
    %1363 = vmatprep.mubr.f32.mxu0 %v1252
    %1364 = vmatmul.mubr.f32.gmra.mrb[0].mxu0 %v1251
    %v1365 = vpop.f32.mrb[0].mxu0
    %v1366 = vadd.f32 0.0, %v1365
    %v1367 = vpop.f32.mrb[0].mxu0
    %v1368 = vadd.f32 0.0, %v1367
    %1369 = vmatprep.mubr.f32.mxu0 %v1254
    %1370 = vmatmul.mubr.f32.gmra.mrb[0].mxu0 %v1253
    %v1371 = vpop.f32.mrb[0].mxu0
    %v1372 = vadd.f32 0.0, %v1371
    %v1373 = vpop.f32.mrb[0].mxu0
    %v1374 = vadd.f32 0.0, %v1373
    %1375 = vmatprep.mubr.f32.mxu0 %v1256
    %1376 = vmatmul.mubr.f32.gmra.mrb[0].mxu0 %v1255
    %v1377 = vpop.f32.mrb[0].mxu0
    %v1378 = vadd.f32 0.0, %v1377
    %v1379 = vpop.f32.mrb[0].mxu0
    %v1380 = vadd.f32 0.0, %v1379
    %1381 = vdwg.mxu0
    %1382 = vmatprep.subr.mxu0 %v988
    %1383 = vmatpush1.msra.mxu0 %v986
    %1384 = vmatprep.subr.mxu0 %v996
    %1385 = vmatpush1.msra.mxu0 %v994
    %1386 = vmatprep.subr.mxu0 %v1004
    %1387 = vmatpush1.msra.mxu0 %v1002
    %1388 = vmatprep.subr.mxu0 %v1012
    %1389 = vmatpush1.msra.mxu0 %v1010
    %1390 = vmatprep.subr.mxu0 %v1020
    %1391 = vmatpush1.msra.mxu0 %v1018
    %1392 = vmatprep.subr.mxu0 %v1028
    %1393 = vmatpush1.msra.mxu0 %v1026
    %1394 = vmatprep.subr.mxu0 %v1036
    %1395 = vmatpush1.msra.mxu0 %v1034
    %1396 = vmatprep.subr.mxu0 %v1044
    %1397 = vmatpush1.msra.mxu0 %v1042
    %1398 = vmatprep.subr.mxu0 %v1052
    %1399 = vmatpush1.msra.mxu0 %v1050
    %1400 = vmatprep.subr.mxu0 %v1060
    %1401 = vmatpush1.msra.mxu0 %v1058
    %1402 = vmatprep.subr.mxu0 %v1068
    %1403 = vmatpush1.msra.mxu0 %v1066
    %1404 = vmatprep.subr.mxu0 %v1076
    %1405 = vmatpush1.msra.mxu0 %v1074
    %1406 = vmatprep.subr.mxu0 %v1084
    %1407 = vmatpush1.msra.mxu0 %v1082
    %1408 = vmatprep.subr.mxu0 %v1092
    %1409 = vmatpush1.msra.mxu0 %v1090
    %1410 = vmatprep.subr.mxu0 %v1100
    %1411 = vmatpush1.msra.mxu0 %v1098
    %1412 = vmatprep.subr.mxu0 %v1108
    %1413 = vmatpush1.msra.mxu0 %v1106
    %1414 = vmatprep.subr.mxu0 %v1116
    %1415 = vmatpush1.msra.mxu0 %v1114
    %1416 = vmatprep.subr.mxu0 %v1124
    %1417 = vmatpush1.msra.mxu0 %v1122
    %1418 = vmatprep.subr.mxu0 %v1132
    %1419 = vmatpush1.msra.mxu0 %v1130
    %1420 = vmatprep.subr.mxu0 %v1140
    %1421 = vmatpush1.msra.mxu0 %v1138
    %1422 = vmatprep.subr.mxu0 %v1148
    %1423 = vmatpush1.msra.mxu0 %v1146
    %1424 = vmatprep.subr.mxu0 %v1156
    %1425 = vmatpush1.msra.mxu0 %v1154
    %1426 = vmatprep.subr.mxu0 %v1164
    %1427 = vmatpush1.msra.mxu0 %v1162
    %1428 = vmatprep.subr.mxu0 %v1172
    %1429 = vmatpush1.msra.mxu0 %v1170
    %1430 = vmatprep.subr.mxu0 %v1180
    %1431 = vmatpush1.msra.mxu0 %v1178
    %1432 = vmatprep.subr.mxu0 %v1188
    %1433 = vmatpush1.msra.mxu0 %v1186
    %1434 = vmatprep.subr.mxu0 %v1196
    %1435 = vmatpush1.msra.mxu0 %v1194
    %1436 = vmatprep.subr.mxu0 %v1204
    %1437 = vmatpush1.msra.mxu0 %v1202
    %1438 = vmatprep.subr.mxu0 %v1212
    %1439 = vmatpush1.msra.mxu0 %v1210
    %1440 = vmatprep.subr.mxu0 %v1220
    %1441 = vmatpush1.msra.mxu0 %v1218
    %1442 = vmatprep.subr.mxu0 %v1228
    %1443 = vmatpush1.msra.mxu0 %v1226
    %1444 = vmatprep.subr.mxu0 %v1236
    %1445 = vmatpush1.msra.mxu0 %v1234
    %1446 = vmatprep.mubr.f32.mxu0 %v1238
    %1447 = vmatmul.mubr.f32.gmra.mrb[0].mxu0 %v1237
    %v1448 = vpop.f32.mrb[0].mxu0
    %v1449 = vadd.f32 0.0, %v1448
    %v1450 = vpop.f32.mrb[0].mxu0
    %v1451 = vadd.f32 0.0, %v1450
    %1452 = vmatprep.mubr.f32.mxu0 %v1240
    %1453 = vmatmul.mubr.f32.gmra.mrb[0].mxu0 %v1239
    %v1454 = vpop.f32.mrb[0].mxu0
    %v1455 = vadd.f32 0.0, %v1454
    %v1456 = vpop.f32.mrb[0].mxu0
    %v1457 = vadd.f32 0.0, %v1456
    %1458 = vmatprep.mubr.f32.mxu0 %v1242
    %1459 = vmatmul.mubr.f32.gmra.mrb[0].mxu0 %v1241
    %v1460 = vpop.f32.mrb[0].mxu0
    %v1461 = vadd.f32 0.0, %v1460
    %v1462 = vpop.f32.mrb[0].mxu0
    %v1463 = vadd.f32 0.0, %v1462
    %1464 = vmatprep.mubr.f32.mxu0 %v1244
    %1465 = vmatmul.mubr.f32.gmra.mrb[0].mxu0 %v1243
    %v1466 = vpop.f32.mrb[0].mxu0
    %v1467 = vadd.f32 0.0, %v1466
    %v1468 = vpop.f32.mrb[0].mxu0
    %v1469 = vadd.f32 0.0, %v1468
    %1470 = vmatprep.mubr.f32.mxu0 %v1246
    %1471 = vmatmul.mubr.f32.gmra.mrb[0].mxu0 %v1245
    %v1472 = vpop.f32.mrb[0].mxu0
    %v1473 = vadd.f32 0.0, %v1472
    %v1474 = vpop.f32.mrb[0].mxu0
    %v1475 = vadd.f32 0.0, %v1474
    %1476 = vmatprep.mubr.f32.mxu0 %v1248
    %1477 = vmatmul.mubr.f32.gmra.mrb[0].mxu0 %v1247
    %v1478 = vpop.f32.mrb[0].mxu0
    %v1479 = vadd.f32 0.0, %v1478
    %v1480 = vpop.f32.mrb[0].mxu0
    %v1481 = vadd.f32 0.0, %v1480
    %1482 = vmatprep.mubr.f32.mxu0 %v1250
    %1483 = vmatmul.mubr.f32.gmra.mrb[0].mxu0 %v1249
    %v1484 = vpop.f32.mrb[0].mxu0
    %v1485 = vadd.f32 0.0, %v1484
    %v1486 = vpop.f32.mrb[0].mxu0
    %v1487 = vadd.f32 0.0, %v1486
    %1488 = vmatprep.mubr.f32.mxu0 %v1252
    %1489 = vmatmul.mubr.f32.gmra.mrb[0].mxu0 %v1251
    %v1490 = vpop.f32.mrb[0].mxu0
    %v1491 = vadd.f32 0.0, %v1490
    %v1492 = vpop.f32.mrb[0].mxu0
    %v1493 = vadd.f32 0.0, %v1492
    %1494 = vmatprep.mubr.f32.mxu0 %v1254
    %1495 = vmatmul.mubr.f32.gmra.mrb[0].mxu0 %v1253
    %v1496 = vpop.f32.mrb[0].mxu0
    %v1497 = vadd.f32 0.0, %v1496
    %v1498 = vpop.f32.mrb[0].mxu0
    %v1499 = vadd.f32 0.0, %v1498
    %1500 = vmatprep.mubr.f32.mxu0 %v1256
    %1501 = vmatmul.mubr.f32.gmra.mrb[0].mxu0 %v1255
    %v1502 = vpop.f32.mrb[0].mxu0
    %v1503 = vadd.f32 0.0, %v1502
    %v1504 = vpop.f32.mrb[0].mxu0
    %v1505 = vadd.f32 0.0, %v1504
    %1506 = vdwg.mxu0
    %1507 = vst [vmem:[#allocation5] sm:$0xff] %v1324
    %1508 = vst [vmem:[#allocation5 + $0x8] sm:$0xff] %v1326
    %1509 = vst [vmem:[#allocation5 + $0x10] sm:$0xff] %v1449
    %1510 = vst [vmem:[#allocation5 + $0x18] sm:$0xff] %v1451
    %1511 = vst [vmem:[#allocation5 + $0x20] sm:$0xff] %v1330
    %1512 = vst [vmem:[#allocation5 + $0x28] sm:$0xff] %v1332
    %1513 = vst [vmem:[#allocation5 + $0x30] sm:$0xff] %v1455
    %1514 = vst [vmem:[#allocation5 + $0x38] sm:$0xff] %v1457
    %1515 = vst [vmem:[#allocation5 + $0x40] sm:$0xff] %v1336
    %1516 = vst [vmem:[#allocation5 + $0x48] sm:$0xff] %v1338
    %1517 = vst [vmem:[#allocation5 + $0x50] sm:$0xff] %v1461
    %1518 = vst [vmem:[#allocation5 + $0x58] sm:$0xff] %v1463
    %1519 = vst [vmem:[#allocation5 + $0x60] sm:$0xff] %v1342
    %1520 = vst [vmem:[#allocation5 + $0x68] sm:$0xff] %v1344
    %1521 = vst [vmem:[#allocation5 + $0x70] sm:$0xff] %v1467
    %1522 = vst [vmem:[#allocation5 + $0x78] sm:$0xff] %v1469
    %1523 = vst [vmem:[#allocation5 + $0x80] sm:$0xff] %v1348
    %1524 = vst [vmem:[#allocation5 + $0x88] sm:$0xff] %v1350
    %1525 = vst [vmem:[#allocation5 + $0x90] sm:$0xff] %v1473
    %1526 = vst [vmem:[#allocation5 + $0x98] sm:$0xff] %v1475
    %1527 = vst [vmem:[#allocation5 + $0xa0] sm:$0xff] %v1354
    %1528 = vst [vmem:[#allocation5 + $0xa8] sm:$0xff] %v1356
    %1529 = vst [vmem:[#allocation5 + $0xb0] sm:$0xff] %v1479
    %1530 = vst [vmem:[#allocation5 + $0xb8] sm:$0xff] %v1481
    %1531 = vst [vmem:[#allocation5 + $0xc0] sm:$0xff] %v1360
    %1532 = vst [vmem:[#allocation5 + $0xc8] sm:$0xff] %v1362
    %1533 = vst [vmem:[#allocation5 + $0xd0] sm:$0xff] %v1485
    %1534 = vst [vmem:[#allocation5 + $0xd8] sm:$0xff] %v1487
    %1535 = vst [vmem:[#allocation5 + $0xe0] sm:$0xff] %v1366
    %1536 = vst [vmem:[#allocation5 + $0xe8] sm:$0xff] %v1368
    %1537 = vst [vmem:[#allocation5 + $0xf0] sm:$0xff] %v1491
    %1538 = vst [vmem:[#allocation5 + $0xf8] sm:$0xff] %v1493
    %1539 = vst [vmem:[#allocation5 + $0x100] sm:$0xff] %v1372
    %1540 = vst [vmem:[#allocation5 + $0x108] sm:$0xff] %v1374
    %1541 = vst [vmem:[#allocation5 + $0x110] sm:$0xff] %v1497
    %1542 = vst [vmem:[#allocation5 + $0x118] sm:$0xff] %v1499
    %1543 = vst [vmem:[#allocation5 + $0x120] sm:$0x7] %v1378
    %1544 = vst [vmem:[#allocation5 + $0x128] sm:$0x7] %v1380
    %1545 = vst [vmem:[#allocation5 + $0x130] sm:$0x7] %v1503
    %1546 = vst [vmem:[#allocation5 + $0x138] sm:$0x7] %v1505
    // Predicated region
    $region18: #{tpu_custom_call.1} parent=1 // pred_check
      _
    $region19: #{tpu_custom_call.1} parent=1 // pred_check_branch
      %1548 = sbr.rel (0) target = $region21
    $region20: #{tpu_custom_call.1} parent=1 // pred_region
      %s1550 = ssub.s32 5120, 5120
      %1551 = vsyncadd [#allocation4], %s1550
      %s1552 = sshll.u32 [#allocation5], 4
      %s1553 = int_to_ptr.vmem [resolvable:$true] %s1552
      %1558 = dma.vmem_to_hbm [thread:$0]  %s1553, 5120, %s3, [#allocation4], 512, 512, 32
    $region21: #{tpu_custom_call.1} parent=1 // pred_fallthru
      _
    // Predicated region
    $region22: #{tpu_custom_call.1} parent=1 // pred_check
      _
    $region23: #{tpu_custom_call.1} parent=1 // pred_check_branch
      %1560 = sbr.rel (0) target = $region25
    $region24: #{tpu_custom_call.1} parent=1 // pred_region
      %1561 = dma.done [#allocation4], 5120
    $region25: #{tpu_custom_call.1} parent=1 // pred_fallthru
      _
    %1562 = vsyncpa [#allocation3], 1
    %1563 = vsyncpa [#allocation4], 1

</llo_original>
